<compile_context>
chip_gen: v7x
topology: tpu7x:2x2x1
jax: 0.10.0
libtpu: 0.0.40
codegen_flags: <defaults>
</compile_context>

<pallas_src>
import math

import jax
import jax.numpy as jnp
from jax.experimental import pallas as pl
from jax.experimental.pallas import tpu as pltpu


# ----------------------------------------------------------------------------
# Fused per-frame kernel: bilinear combine (weights already include xz_sph)
#   -> d_up / d_down -> global maxes -> cmask threshold -> packed dists.
# Block = one frame; grid iterates (in parallel) over the batch.
# ----------------------------------------------------------------------------
def _d2l_fused_kernel(g_ref, w_ref, cmask_ref, dup_ref, ddn_ref, dist_ref):
    # Per-corner accumulation: peak live vector state ~3 (fp,fp) tiles instead of a
    # full (8,fp,fp) f32 temporary (512 KiB = 2x the 64-vreg file -> spills).
    d_up = (g_ref[0] * w_ref[0] + g_ref[1] * w_ref[1]
            + g_ref[2] * w_ref[2] + g_ref[3] * w_ref[3])
    d_dn = (g_ref[4] * w_ref[4] + g_ref[5] * w_ref[5]
            + g_ref[6] * w_ref[6] + g_ref[7] * w_ref[7])

    c_max = jnp.max(d_up)          # scalar global maxes (XLU reduce)
    f_max = jnp.max(d_dn)

    cmask_ref[...] = (d_up > 0.95 * c_max).astype(jnp.uint8)
    dup_ref[...] = d_up
    ddn_ref[...] = d_dn

    # Lane-dense packed scalars: lane 0 = c_dist, lanes 1.. = f_dist.
    lane = jax.lax.broadcasted_iota(jnp.int32, (1, 128), 1)
    dist_ref[...] = jnp.where(lane == 0, c_max, f_max)


def _d2l_fused(gathered, weights):
    B, _, fp, _ = gathered.shape
    return pl.pallas_call(
        _d2l_fused_kernel,
        out_shape=(
            jax.ShapeDtypeStruct((B, fp, fp), jnp.uint8),    # cmask (0/1)
            jax.ShapeDtypeStruct((B, fp, fp), jnp.float32),  # d_up
            jax.ShapeDtypeStruct((B, fp, fp), jnp.float32),  # d_down
            jax.ShapeDtypeStruct((B, 1, 128), jnp.float32),  # [c_dist, f_dist, ...]
        ),
        grid=(B,),
        in_specs=[
            # per-frame gathered corners (XLA may fuse the gather into this operand)
            pl.BlockSpec((pl.Squeezed(), 8, fp, fp), lambda b: (b, 0, 0, 0)),
            # static weights: constant block index -> fetched once, not re-DMA'd per step
            pl.BlockSpec((8, fp, fp), lambda b: (0, 0, 0)),
        ],
        out_specs=(
            pl.BlockSpec((pl.Squeezed(), fp, fp), lambda b: (b, 0, 0)),
            pl.BlockSpec((pl.Squeezed(), fp, fp), lambda b: (b, 0, 0)),
            pl.BlockSpec((pl.Squeezed(), fp, fp), lambda b: (b, 0, 0)),
            pl.BlockSpec((pl.Squeezed(), 1, 128), lambda b: (b, 0, 0)),
        ),
        compiler_params=pltpu.CompilerParams(
            dimension_semantics=("parallel",),       # batch axis -> both TCs on v7x
            allow_input_fusion=[True, False],        # fuse the gather, not the consts
        ),
    )(gathered, weights)


def _d2l_tensor_path(depth, gather_idx, gather_w):
    # depth: (B, H, W) euclidean depth.  One batched XLA gather for all
    # 4 corners x 2 views, then the fused Pallas kernel does the rest.
    B = depth.shape[0]
    depth_flat = depth.reshape(B, -1)
    gathered = jnp.take(depth_flat, gather_idx, axis=1, mode="clip")  # (B, 8, fp, fp)
    return _d2l_fused(gathered, gather_w)


_d2l_tensor_path_jit = jax.jit(_d2l_tensor_path)


# ----------------------------------------------------------------------------
# D2L wrapper
# ----------------------------------------------------------------------------
class D2LPallas:
    """Pallas/JAX port of D2L's tensor hot path (depth -> cmask, c_dist, f_dist, fl)."""

    def __init__(self, H=64, W=256, fp_size=128, fp_fov=165.0):
        self.img_size = [W, H]
        self.H, self.W = H, W
        self.fp_size = fp_size
        self.fp_fov = fp_fov

        # xz_sph: deterministic "atlanta sphere" map — |vertical component| of the unit
        # viewing ray per equirect pixel.
        # TODO(synk): exact EPC.atlanta_sphere formula unavailable; using |sin(latitude)|.
        lat_eq = (0.5 - (jnp.arange(H, dtype=jnp.float32) + 0.5) / H) * math.pi
        self.xz_sph = jnp.broadcast_to(
            jnp.abs(jnp.sin(lat_eq))[:, None], (H, W)).astype(jnp.float32)
        sph_flat = self.xz_sph.reshape(-1)

        # ---------- static E2P sampling maps (hoisted out of forward) ----------
        fov = math.radians(fp_fov)
        half_tan = math.tan(fov / 2.0)
        self.fl = fp_size / (2.0 * half_tan)   # focal length, as in E2P(return_fl=True)

        c = (jnp.arange(fp_size, dtype=jnp.float32) + 0.5) / fp_size * 2.0 - 1.0
        X = jnp.broadcast_to(c[None, :] * half_tan, (fp_size, fp_size))
        Z = jnp.broadcast_to(c[:, None] * half_tan, (fp_size, fp_size))
        norm = jnp.sqrt(X * X + 1.0 + Z * Z)          # |Y| = 1 for both views
        lat_up = jnp.arcsin(1.0 / norm)               # lat_down = -lat_up
        lon = jnp.arctan2(X, Z)                       # shared by both views

        u = (lon / (2.0 * math.pi) + 0.5) * W - 0.5   # shared by both views
        v_up = (0.5 - lat_up / math.pi) * H - 0.5
        v_dn = (0.5 + lat_up / math.pi) * H - 0.5

        def corners(u, v):
            u0 = jnp.floor(u)
            v0 = jnp.floor(v)
            du = u - u0
            dv = v - v0
            u0i = jnp.mod(u0.astype(jnp.int32), W)            # wrap in longitude
            u1i = jnp.mod(u0i + 1, W)
            v0i = jnp.clip(v0.astype(jnp.int32), 0, H - 1)    # clamp at poles (border)
            v1i = jnp.clip(v0i + 1, 0, H - 1)
            idx = jnp.stack([v0i * W + u0i, v0i * W + u1i,
                             v1i * W + u0i, v1i * W + u1i], axis=0)
            w = jnp.stack([(1.0 - du) * (1.0 - dv), du * (1.0 - dv),
                           (1.0 - du) * dv, du * dv], axis=0)
            return idx, w

        idx_up, w_up = corners(u, v_up)
        idx_dn, w_dn = corners(u, v_dn)
        self.gather_idx = jnp.concatenate([idx_up, idx_dn], axis=0)      # (8, fp, fp) i32
        self._w_bilinear = jnp.concatenate([w_up, w_dn], axis=0)         # raw weights
        # Fold the planar-depth multiply (stage 1) into the sampling weights (kept f32 —
        # simplest on v5e, and the streams are tiny anyway).
        self.gather_w = (self._w_bilinear * sph_flat[self.gather_idx]
                         ).astype(jnp.float32)                           # (8, fp, fp) f32

    # depth (B,H,W) -> (cmask u8 (B,fp,fp), d_up, d_down, dists (B,1,128))
    def _run(self, src_depth):
        return _d2l_tensor_path_jit(src_depth, self.gather_idx, self.gather_w)

    # ---- batched API (one gather + one batched pallas_call) ----
    def batched_atlanta_transform_from_depth(self, src_depth):
        _, d_up, d_down, dists = self._run(src_depth)
        return d_up, d_down, dists[:, 0, 0], dists[:, 0, 1], self.fl

    def batched_cmask_from_depth(self, src_depth):
        cmask, _, _, dists = self._run(src_depth)
        return cmask, dists[:, 0, 0], dists[:, 0, 1], self.fl

    # ---- single-frame API matching the original module (depth shaped (1,H,W)) ----
    def atlanta_transform_from_depth(self, src_depth):
        d_up, d_down, c_dist, f_dist, fl = self.batched_atlanta_transform_from_depth(src_depth)
        return d_up[0], d_down[0], c_dist[0], f_dist[0], fl

    def cmask_from_depth(self, src_depth):
        cmask, c_dist, f_dist, fl = self.batched_cmask_from_depth(src_depth)
        # NOTE: cmask is uint8 (0/1); original returns float but its only consumer is
        # cv2.findContours which requires uint8 anyway.
        return cmask[0], c_dist[0], f_dist[0], fl

    def forward(self, depth, tr=None):
        cmask, c_dist, f_dist, fl = self.cmask_from_depth(depth)
        # TODO(synk): cv2.findContours/approxPolyDP, contour_pts2equi_layout, cor_2_1d and
        #             MW_post_processing are host-side OpenCV/numpy code with data-dependent
        #             shapes — no Pallas equivalent; forward stops at the tensor stage.
        return cmask, c_dist, f_dist, fl


if __name__ == "__main__":
    key = jax.random.PRNGKey(0)
    H, W, FP, B = 64, 256, 128, 2
    model = D2LPallas(H=H, W=W, fp_size=FP, fp_fov=165.0)
    # (B, H, W) euclidean depth, strictly positive
    depth = 1.5 + jax.random.uniform(key, (B, H, W), dtype=jnp.float32)

    # Batched path
    d_up, d_dn, c_dist, f_dist, fl = model.batched_atlanta_transform_from_depth(depth)
    cmask_b, c_b, f_b, _ = model.batched_cmask_from_depth(depth)
    jax.block_until_ready((d_up, d_dn, c_dist, f_dist, cmask_b))

    # Single-frame forward() (original module signature)
    cmask0, c0, f0, fl0 = model.forward(depth[:1])
    jax.block_until_ready(cmask0)

    # Correctness check vs. an unfused pure-JAX reference
    # (planar = depth * sph first, then raw bilinear weights).
    planar_flat = (depth * model.xz_sph[None]).reshape(B, -1)
    g_ref = jnp.take(planar_flat, model.gather_idx, axis=1)            # (B,8,FP,FP)
    wb = model._w_bilinear
    ref_up = (g_ref[:, 0] * wb[0] + g_ref[:, 1] * wb[1]
              + g_ref[:, 2] * wb[2] + g_ref[:, 3] * wb[3])
    ref_dn = (g_ref[:, 4] * wb[4] + g_ref[:, 5] * wb[5]
              + g_ref[:, 6] * wb[6] + g_ref[:, 7] * wb[7])
    ref_cmax = jnp.max(ref_up, axis=(1, 2))
    ref_fmax = jnp.max(ref_dn, axis=(1, 2))
    ref_cmask = (ref_up > 0.95 * ref_cmax[:, None, None]).astype(jnp.uint8)

    assert jnp.allclose(d_up, ref_up, rtol=1e-5, atol=1e-5)
    assert jnp.allclose(d_dn, ref_dn, rtol=1e-5, atol=1e-5)
    assert jnp.allclose(c_dist, ref_cmax, rtol=1e-5, atol=1e-5)
    assert jnp.allclose(f_dist, ref_fmax, rtol=1e-5, atol=1e-5)
    # cmask: allow a vanishing fraction of threshold-adjacent (1-ulp) disagreements.
    mismatch = jnp.mean(jnp.abs(cmask_b.astype(jnp.int32) - ref_cmask.astype(jnp.int32)))
    assert mismatch < 1e-3
    assert cmask_b.shape == (B, FP, FP) and cmask_b.dtype == jnp.uint8
    assert cmask0.shape == (FP, FP) and cmask0.dtype == jnp.uint8
    assert jnp.allclose(c0, ref_cmax[0], rtol=1e-5) and jnp.allclose(f0, ref_fmax[0], rtol=1e-5)
    print("KERNEL_OK")
</pallas_src>

<mosaic_0001>
module attributes {stable_mosaic.version = 11 : i64} {
  func.func @_d2l_fused_kernel(%arg0: i32, %arg1: memref<1x8x128x128xf32, #tpu.memory_space<vmem>>, %arg2: memref<8x128x128xf32, #tpu.memory_space<vmem>>, %arg3: memref<1x128x128xi8, #tpu.memory_space<vmem>>, %arg4: memref<1x128x128xf32, #tpu.memory_space<vmem>>, %arg5: memref<1x128x128xf32, #tpu.memory_space<vmem>>, %arg6: memref<1x1x128xf32, #tpu.memory_space<vmem>>) attributes {dimension_semantics = [#tpu.dimension_semantics<parallel>], iteration_bounds = array<i64: 2>, scalar_prefetch = 0 : i64, scratch_operands = 0 : i64, tpu.core_type = #tpu.core_type<tc>, window_params = [{transform_indices = @transform_0, window_bounds = array<i64: 1, 8, 128, 128>}, {pipeline_mode = #tpu.pipeline_mode<synchronous>, transform_indices = @transform_1, window_bounds = array<i64: 8, 128, 128>}, {transform_indices = @transform_2, window_bounds = array<i64: 1, 128, 128>}, {transform_indices = @transform_3, window_bounds = array<i64: 1, 128, 128>}, {transform_indices = @transform_4, window_bounds = array<i64: 1, 128, 128>}, {transform_indices = @transform_5, window_bounds = array<i64: 1, 1, 128>}]} {
    %c0 = arith.constant 0 : index
    %c0_0 = arith.constant 0 : index
    %c0_1 = arith.constant 0 : index
    %c0_2 = arith.constant 0 : index
    %0 = vector.load %arg1[%c0, %c0_0, %c0_1, %c0_2] : memref<1x8x128x128xf32, #tpu.memory_space<vmem>>, vector<1x1x128x128xf32>
    %1 = vector.shape_cast %0 : vector<1x1x128x128xf32> to vector<128x128xf32>
    %c0_3 = arith.constant 0 : index
    %c0_4 = arith.constant 0 : index
    %c0_5 = arith.constant 0 : index
    %2 = vector.load %arg2[%c0_3, %c0_4, %c0_5] : memref<8x128x128xf32, #tpu.memory_space<vmem>>, vector<1x128x128xf32>
    %3 = vector.shape_cast %2 : vector<1x128x128xf32> to vector<128x128xf32>
    %4 = arith.mulf %1, %3 : vector<128x128xf32>
    %c0_6 = arith.constant 0 : index
    %c1 = arith.constant 1 : index
    %c0_7 = arith.constant 0 : index
    %c0_8 = arith.constant 0 : index
    %5 = vector.load %arg1[%c0_6, %c1, %c0_7, %c0_8] : memref<1x8x128x128xf32, #tpu.memory_space<vmem>>, vector<1x1x128x128xf32>
    %6 = vector.shape_cast %5 : vector<1x1x128x128xf32> to vector<128x128xf32>
    %c1_9 = arith.constant 1 : index
    %c0_10 = arith.constant 0 : index
    %c0_11 = arith.constant 0 : index
    %7 = vector.load %arg2[%c1_9, %c0_10, %c0_11] : memref<8x128x128xf32, #tpu.memory_space<vmem>>, vector<1x128x128xf32>
    %8 = vector.shape_cast %7 : vector<1x128x128xf32> to vector<128x128xf32>
    %9 = arith.mulf %6, %8 : vector<128x128xf32>
    %10 = arith.addf %4, %9 : vector<128x128xf32>
    %c0_12 = arith.constant 0 : index
    %c2 = arith.constant 2 : index
    %c0_13 = arith.constant 0 : index
    %c0_14 = arith.constant 0 : index
    %11 = vector.load %arg1[%c0_12, %c2, %c0_13, %c0_14] : memref<1x8x128x128xf32, #tpu.memory_space<vmem>>, vector<1x1x128x128xf32>
    %12 = vector.shape_cast %11 : vector<1x1x128x128xf32> to vector<128x128xf32>
    %c2_15 = arith.constant 2 : index
    %c0_16 = arith.constant 0 : index
    %c0_17 = arith.constant 0 : index
    %13 = vector.load %arg2[%c2_15, %c0_16, %c0_17] : memref<8x128x128xf32, #tpu.memory_space<vmem>>, vector<1x128x128xf32>
    %14 = vector.shape_cast %13 : vector<1x128x128xf32> to vector<128x128xf32>
    %15 = arith.mulf %12, %14 : vector<128x128xf32>
    %16 = arith.addf %10, %15 : vector<128x128xf32>
    %c0_18 = arith.constant 0 : index
    %c3 = arith.constant 3 : index
    %c0_19 = arith.constant 0 : index
    %c0_20 = arith.constant 0 : index
    %17 = vector.load %arg1[%c0_18, %c3, %c0_19, %c0_20] : memref<1x8x128x128xf32, #tpu.memory_space<vmem>>, vector<1x1x128x128xf32>
    %18 = vector.shape_cast %17 : vector<1x1x128x128xf32> to vector<128x128xf32>
    %c3_21 = arith.constant 3 : index
    %c0_22 = arith.constant 0 : index
    %c0_23 = arith.constant 0 : index
    %19 = vector.load %arg2[%c3_21, %c0_22, %c0_23] : memref<8x128x128xf32, #tpu.memory_space<vmem>>, vector<1x128x128xf32>
    %20 = vector.shape_cast %19 : vector<1x128x128xf32> to vector<128x128xf32>
    %21 = arith.mulf %18, %20 : vector<128x128xf32>
    %22 = arith.addf %16, %21 : vector<128x128xf32>
    %c0_24 = arith.constant 0 : index
    %c4 = arith.constant 4 : index
    %c0_25 = arith.constant 0 : index
    %c0_26 = arith.constant 0 : index
    %23 = vector.load %arg1[%c0_24, %c4, %c0_25, %c0_26] : memref<1x8x128x128xf32, #tpu.memory_space<vmem>>, vector<1x1x128x128xf32>
    %24 = vector.shape_cast %23 : vector<1x1x128x128xf32> to vector<128x128xf32>
    %c4_27 = arith.constant 4 : index
    %c0_28 = arith.constant 0 : index
    %c0_29 = arith.constant 0 : index
    %25 = vector.load %arg2[%c4_27, %c0_28, %c0_29] : memref<8x128x128xf32, #tpu.memory_space<vmem>>, vector<1x128x128xf32>
    %26 = vector.shape_cast %25 : vector<1x128x128xf32> to vector<128x128xf32>
    %27 = arith.mulf %24, %26 : vector<128x128xf32>
    %c0_30 = arith.constant 0 : index
    %c5 = arith.constant 5 : index
    %c0_31 = arith.constant 0 : index
    %c0_32 = arith.constant 0 : index
    %28 = vector.load %arg1[%c0_30, %c5, %c0_31, %c0_32] : memref<1x8x128x128xf32, #tpu.memory_space<vmem>>, vector<1x1x128x128xf32>
    %29 = vector.shape_cast %28 : vector<1x1x128x128xf32> to vector<128x128xf32>
    %c5_33 = arith.constant 5 : index
    %c0_34 = arith.constant 0 : index
    %c0_35 = arith.constant 0 : index
    %30 = vector.load %arg2[%c5_33, %c0_34, %c0_35] : memref<8x128x128xf32, #tpu.memory_space<vmem>>, vector<1x128x128xf32>
    %31 = vector.shape_cast %30 : vector<1x128x128xf32> to vector<128x128xf32>
    %32 = arith.mulf %29, %31 : vector<128x128xf32>
    %33 = arith.addf %27, %32 : vector<128x128xf32>
    %c0_36 = arith.constant 0 : index
    %c6 = arith.constant 6 : index
    %c0_37 = arith.constant 0 : index
    %c0_38 = arith.constant 0 : index
    %34 = vector.load %arg1[%c0_36, %c6, %c0_37, %c0_38] : memref<1x8x128x128xf32, #tpu.memory_space<vmem>>, vector<1x1x128x128xf32>
    %35 = vector.shape_cast %34 : vector<1x1x128x128xf32> to vector<128x128xf32>
    %c6_39 = arith.constant 6 : index
    %c0_40 = arith.constant 0 : index
    %c0_41 = arith.constant 0 : index
    %36 = vector.load %arg2[%c6_39, %c0_40, %c0_41] : memref<8x128x128xf32, #tpu.memory_space<vmem>>, vector<1x128x128xf32>
    %37 = vector.shape_cast %36 : vector<1x128x128xf32> to vector<128x128xf32>
    %38 = arith.mulf %35, %37 : vector<128x128xf32>
    %39 = arith.addf %33, %38 : vector<128x128xf32>
    %c0_42 = arith.constant 0 : index
    %c7 = arith.constant 7 : index
    %c0_43 = arith.constant 0 : index
    %c0_44 = arith.constant 0 : index
    %40 = vector.load %arg1[%c0_42, %c7, %c0_43, %c0_44] : memref<1x8x128x128xf32, #tpu.memory_space<vmem>>, vector<1x1x128x128xf32>
    %41 = vector.shape_cast %40 : vector<1x1x128x128xf32> to vector<128x128xf32>
    %c7_45 = arith.constant 7 : index
    %c0_46 = arith.constant 0 : index
    %c0_47 = arith.constant 0 : index
    %42 = vector.load %arg2[%c7_45, %c0_46, %c0_47] : memref<8x128x128xf32, #tpu.memory_space<vmem>>, vector<1x128x128xf32>
    %43 = vector.shape_cast %42 : vector<1x128x128xf32> to vector<128x128xf32>
    %44 = arith.mulf %41, %43 : vector<128x128xf32>
    %45 = arith.addf %39, %44 : vector<128x128xf32>
    %46 = vector.shape_cast %22 : vector<128x128xf32> to vector<1x128x128xf32>
    %cst = arith.constant dense<0xFF800000> : vector<1xf32>
    %47 = vector.multi_reduction <maximumf>, %46, %cst [1, 2] : vector<1x128x128xf32> to vector<1xf32>
    %48 = vector.shape_cast %47 : vector<1xf32> to vector<1x1x1xf32>
    %49 = vector.extract %48[0, 0, 0] : f32 from vector<1x1x1xf32>
    %50 = vector.shape_cast %45 : vector<128x128xf32> to vector<1x128x128xf32>
    %cst_48 = arith.constant dense<0xFF800000> : vector<1xf32>
    %51 = vector.multi_reduction <maximumf>, %50, %cst_48 [1, 2] : vector<1x128x128xf32> to vector<1xf32>
    %52 = vector.shape_cast %51 : vector<1xf32> to vector<1x1x1xf32>
    %53 = vector.extract %52[0, 0, 0] : f32 from vector<1x1x1xf32>
    %cst_49 = arith.constant 0.949999988 : f32
    %54 = arith.mulf %cst_49, %49 : f32
    %55 = vector.broadcast %54 : f32 to vector<128x128xf32>
    %56 = arith.cmpf ogt, %22, %55 : vector<128x128xf32>
    %57 = arith.extui %56 : vector<128x128xi1> to vector<128x128xi8>
    %c0_50 = arith.constant 0 : index
    %c0_51 = arith.constant 0 : index
    %c0_52 = arith.constant 0 : index
    %58 = vector.load %arg3[%c0_50, %c0_51, %c0_52] : memref<1x128x128xi8, #tpu.memory_space<vmem>>, vector<1x128x128xi8>
    %59 = vector.shape_cast %58 : vector<1x128x128xi8> to vector<128x128xi8>
    %60 = vector.shape_cast %57 : vector<128x128xi8> to vector<1x128x128xi8>
    tpu.vector_store %arg3[%c0_50, %c0_51, %c0_52], %60 {strides = array<i32>} : memref<1x128x128xi8, #tpu.memory_space<vmem>>, vector<1x128x128xi8>,
    %c0_53 = arith.constant 0 : index
    %c0_54 = arith.constant 0 : index
    %c0_55 = arith.constant 0 : index
    %61 = vector.load %arg4[%c0_53, %c0_54, %c0_55] : memref<1x128x128xf32, #tpu.memory_space<vmem>>, vector<1x128x128xf32>
    %62 = vector.shape_cast %61 : vector<1x128x128xf32> to vector<128x128xf32>
    %63 = vector.shape_cast %22 : vector<128x128xf32> to vector<1x128x128xf32>
    tpu.vector_store %arg4[%c0_53, %c0_54, %c0_55], %63 {strides = array<i32>} : memref<1x128x128xf32, #tpu.memory_space<vmem>>, vector<1x128x128xf32>,
    %c0_56 = arith.constant 0 : index
    %c0_57 = arith.constant 0 : index
    %c0_58 = arith.constant 0 : index
    %64 = vector.load %arg5[%c0_56, %c0_57, %c0_58] : memref<1x128x128xf32, #tpu.memory_space<vmem>>, vector<1x128x128xf32>
    %65 = vector.shape_cast %64 : vector<1x128x128xf32> to vector<128x128xf32>
    %66 = vector.shape_cast %45 : vector<128x128xf32> to vector<1x128x128xf32>
    tpu.vector_store %arg5[%c0_56, %c0_57, %c0_58], %66 {strides = array<i32>} : memref<1x128x128xf32, #tpu.memory_space<vmem>>, vector<1x128x128xf32>,
    %67 = tpu.iota {dimensions = array<i32: 1>} : vector<1x128xi32>
    %c0_i32 = arith.constant 0 : i32
    %68 = vector.broadcast %c0_i32 : i32 to vector<1x128xi32>
    %69 = arith.cmpi eq, %67, %68 : vector<1x128xi32>
    %70 = vector.broadcast %49 : f32 to vector<1x128xf32>
    %71 = vector.broadcast %53 : f32 to vector<1x128xf32>
    %72 = arith.select %69, %70, %71 : vector<1x128xi1>, vector<1x128xf32>
    %c0_59 = arith.constant 0 : index
    %c0_60 = arith.constant 0 : index
    %c0_61 = arith.constant 0 : index
    %73 = vector.load %arg6[%c0_59, %c0_60, %c0_61] : memref<1x1x128xf32, #tpu.memory_space<vmem>>, vector<1x1x128xf32>
    %74 = vector.shape_cast %73 : vector<1x1x128xf32> to vector<1x128xf32>
    %75 = vector.shape_cast %72 : vector<1x128xf32> to vector<1x1x128xf32>
    tpu.vector_store %arg6[%c0_59, %c0_60, %c0_61], %75 {strides = array<i32>} : memref<1x1x128xf32, #tpu.memory_space<vmem>>, vector<1x1x128xf32>,
    return
  }
  func.func @transform_0(%arg0: i32) -> (i32, i32, i32, i32) {
    %c0_i32 = arith.constant 0 : i32
    %c0_i32_0 = arith.constant 0 : i32
    %c0_i32_1 = arith.constant 0 : i32
    %c0_i32_2 = arith.constant 0 : i32
    return %arg0, %c0_i32, %c0_i32_0, %c0_i32_1 : i32, i32, i32, i32
  }
  func.func @transform_1(%arg0: i32) -> (i32, i32, i32) {
    %c0_i32 = arith.constant 0 : i32
    %c0_i32_0 = arith.constant 0 : i32
    %c0_i32_1 = arith.constant 0 : i32
    %c0_i32_2 = arith.constant 0 : i32
    return %c0_i32, %c0_i32_0, %c0_i32_1 : i32, i32, i32
  }
  func.func @transform_2(%arg0: i32) -> (i32, i32, i32) {
    %c0_i32 = arith.constant 0 : i32
    %c0_i32_0 = arith.constant 0 : i32
    %c0_i32_1 = arith.constant 0 : i32
    return %arg0, %c0_i32, %c0_i32_0 : i32, i32, i32
  }
  func.func @transform_3(%arg0: i32) -> (i32, i32, i32) {
    %c0_i32 = arith.constant 0 : i32
    %c0_i32_0 = arith.constant 0 : i32
    %c0_i32_1 = arith.constant 0 : i32
    return %arg0, %c0_i32, %c0_i32_0 : i32, i32, i32
  }
  func.func @transform_4(%arg0: i32) -> (i32, i32, i32) {
    %c0_i32 = arith.constant 0 : i32
    %c0_i32_0 = arith.constant 0 : i32
    %c0_i32_1 = arith.constant 0 : i32
    return %arg0, %c0_i32, %c0_i32_0 : i32, i32, i32
  }
  func.func @transform_5(%arg0: i32) -> (i32, i32, i32) {
    %c0_i32 = arith.constant 0 : i32
    %c0_i32_0 = arith.constant 0 : i32
    %c0_i32_1 = arith.constant 0 : i32
    return %arg0, %c0_i32, %c0_i32_0 : i32, i32, i32
  }
}

</mosaic_0001>

<llo_original>
// kernel: _d2l_tensor_path.2
$region0: #{_d2l_tensor_path.2}
  #allocation0 [shape = 'u32[]', space=smem, size = 0x4, offset = 0x4, fixed_abs, tag = 'smem constant byte address 0x4 - core index']
  #allocation1 [shape = 'u32[144,128]{1,0:T(1,128)}', space=vmem, size = 0x12000, scoped, tag = 'internal scratch']
  %s0 = inlined_call_operand.vmem [shape: f32[8,128,128], index: 0, kind: input, shape index: {}]
  %s1 = inlined_call_operand.vmem [shape: f32[8,128,128,2], index: 1, kind: input, shape index: {}]
  %s2 = inlined_call_operand.hbm [shape: u8[2,128,128], index: 2, kind: output, shape index: {0}]
  %s3 = inlined_call_operand.hbm [shape: f32[2,128,128], index: 3, kind: output, shape index: {1}]
  %s4 = inlined_call_operand.hbm [shape: f32[2,128,128], index: 4, kind: output, shape index: {2}]
  %s5 = inlined_call_operand.hbm [shape: f32[2,1,128], index: 5, kind: output, shape index: {3}]
  %6 = xla_tuple %s2, %s3, %s4, %s5
  %s7 = sld [smem:[#allocation0]]
  $region65: #{_d2l_tensor_path.2} parent=0
    _
  %s9 = ssub.s32 1, %s7
  %s10 = scalar_select 0, %s9, %s7
  $region1: #{_d2l_tensor_path.2} parent=0
    #allocation2 [shape = 'u8[32768]{0}', space=vmem, size = 0x8000, scoped, tag = 'output window, operand 0']
    #allocation3 [shape = 's32[2]{0}', space=sflag, size = 0x8, scoped, tag = 'scoped memory for _d2l_tensor_path.2']
    #allocation4 [shape = 'u8[131072]{0}', space=vmem, size = 0x20000, scoped, tag = 'output window, operand 1']
    #allocation5 [shape = 's32[2]{0}', space=sflag, size = 0x8, scoped, tag = 'scoped memory for _d2l_tensor_path.2']
    #allocation6 [shape = 'u8[131072]{0}', space=vmem, size = 0x20000, scoped, tag = 'output window, operand 2']
    #allocation7 [shape = 'u8[1024]{0}', space=vmem, size = 0x400, scoped, tag = 'output window, operand 3']
    #allocation8 [shape = 's32[2]{0}', space=sflag, size = 0x8, scoped, tag = 'scoped memory for _d2l_tensor_path.2']
    %11 = vsyncpa [#allocation3], 0
    %s12 = scalar_lea.sflag [#allocation3], 1
    %13 = vsyncpa %s12, 0
    %14 = vsyncpa [#allocation5], 0
    %s15 = scalar_lea.sflag [#allocation5], 1
    %16 = vsyncpa %s15, 0
    %17 = vsyncpa [#allocation8], 0
    %s18 = scalar_lea.sflag [#allocation8], 1
    %19 = vsyncpa %s18, 0
    loop: start=0, step=1, limit=4
    $region2: #{_d2l_tensor_path.2} parent=1 // loop_pre_header
      _
    $region3: #{_d2l_tensor_path.2} parent=1 // loop_header
      %s21 = sphi 0, %s25
      %p22 = scmp.ge.s32.totalorder %s21, 4
      %s31 = sphi 0, %s33
      %s34 = sphi 0, %s31
      %s35 = sphi 0, %s34
      %s51 = sphi 0, %s35
      %s55 = sphi 0, %s55
      %s57 = sphi 0, %s55
      %s58 = sphi 0, %s57
      %s72 = sphi 0, %s58
      %s78 = sphi 0, %s80
      %s81 = sphi 0, %s78
      %s82 = sphi 0, %s81
      %s98 = sphi 0, %s82
      %s104 = sphi 0, %s106
      %s107 = sphi 0, %s104
      %s108 = sphi 0, %s107
      %s124 = sphi 0, %s108
      %s130 = sphi 0, %s132
      %s133 = sphi 0, %s130
      %s134 = sphi 0, %s133
      %s150 = sphi 0, %s134
      %s156 = sphi 0, %s158
      %s159 = sphi 0, %s156
      %s160 = sphi 0, %s159
      %s176 = sphi 0, %s160
    $region4: #{_d2l_tensor_path.2} parent=1 // loop_header_branch
      %24 = sbr.rel (%p22) target = $region8
    $region5: #{_d2l_tensor_path.2} parent=1 // loop_body
      %s26 = ssub.s32 %s21, 1
      %s27 = ssub.s32 %s21, 2
      %s28 = sadd.s32 %s21, 1
      %s29 = ssub.s32 %s21, %s28
      %p30 = scmp.eq.s32.totalorder %s29, 0
      %s32 = sadd.s32 %s31, 1
      %s33 = scalar_select %p30, %s31, %s32
      %p36 = pneg %p30
      %p37 = scmp.eq.s32.totalorder %s21, 1
      %p38 = por %p36, %p37
      %p39 = scmp.ne.s32.totalorder %s31, %s34
      %p40 = scmp.eq.s32.totalorder %s21, 0
      %p41 = por %p39, %p40
      %p42 = scmp.ne.s32.totalorder %s31, %s34
      %p43 = scmp.eq.s32.totalorder %s26, 1
      %p44 = por %p42, %p43
      %p45 = scmp.ne.s32.totalorder %s34, %s35
      %p46 = scmp.eq.s32.totalorder %s26, 0
      %p47 = por %p45, %p46
      %p48 = scmp.ne.s32.totalorder %s34, %s35
      %p49 = scmp.eq.s32.totalorder %s27, 1
      %p50 = por %p48, %p49
      %p52 = scmp.ne.s32.totalorder %s35, %s51
      %p53 = scmp.eq.s32.totalorder %s27, 0
      %p54 = por %p52, %p53
      %s56 = sadd.s32 %s55, 1
      %p59 = scmp.eq.s32.totalorder %s21, 1
      %p60 = scmp.ne.s32.totalorder %s55, %s57
      %p61 = scmp.eq.s32.totalorder %s21, 0
      %p62 = por %p60, %p61
      %p63 = scmp.ne.s32.totalorder %s55, %s57
      %p64 = scmp.eq.s32.totalorder %s26, 1
      %p65 = por %p63, %p64
      %p66 = scmp.ne.s32.totalorder %s57, %s58
      %p67 = scmp.eq.s32.totalorder %s26, 0
      %p68 = por %p66, %p67
      %p69 = scmp.ne.s32.totalorder %s57, %s58
      %p70 = scmp.eq.s32.totalorder %s27, 1
      %p71 = por %p69, %p70
      %p73 = scmp.ne.s32.totalorder %s58, %s72
      %p74 = scmp.eq.s32.totalorder %s27, 0
      %p75 = por %p73, %p74
      %s76 = ssub.s32 %s21, %s28
      %p77 = scmp.eq.s32.totalorder %s76, 0
      %s79 = sadd.s32 %s78, 1
      %s80 = scalar_select %p77, %s78, %s79
      %p83 = pneg %p77
      %p84 = scmp.eq.s32.totalorder %s21, 1
      %p85 = por %p83, %p84
      %p86 = scmp.ne.s32.totalorder %s78, %s81
      %p87 = scmp.eq.s32.totalorder %s21, 0
      %p88 = por %p86, %p87
      %p89 = scmp.ne.s32.totalorder %s78, %s81
      %p90 = scmp.eq.s32.totalorder %s26, 1
      %p91 = por %p89, %p90
      %p92 = scmp.ne.s32.totalorder %s81, %s82
      %p93 = scmp.eq.s32.totalorder %s26, 0
      %p94 = por %p92, %p93
      %p95 = scmp.ne.s32.totalorder %s81, %s82
      %p96 = scmp.eq.s32.totalorder %s27, 1
      %p97 = por %p95, %p96
      %p99 = scmp.ne.s32.totalorder %s82, %s98
      %p100 = scmp.eq.s32.totalorder %s27, 0
      %p101 = por %p99, %p100
      %s102 = ssub.s32 %s21, %s28
      %p103 = scmp.eq.s32.totalorder %s102, 0
      %s105 = sadd.s32 %s104, 1
      %s106 = scalar_select %p103, %s104, %s105
      %p109 = pneg %p103
      %p110 = scmp.eq.s32.totalorder %s21, 1
      %p111 = por %p109, %p110
      %p112 = scmp.ne.s32.totalorder %s104, %s107
      %p113 = scmp.eq.s32.totalorder %s21, 0
      %p114 = por %p112, %p113
      %p115 = scmp.ne.s32.totalorder %s104, %s107
      %p116 = scmp.eq.s32.totalorder %s26, 1
      %p117 = por %p115, %p116
      %p118 = scmp.ne.s32.totalorder %s107, %s108
      %p119 = scmp.eq.s32.totalorder %s26, 0
      %p120 = por %p118, %p119
      %p121 = scmp.ne.s32.totalorder %s107, %s108
      %p122 = scmp.eq.s32.totalorder %s27, 1
      %p123 = por %p121, %p122
      %p125 = scmp.ne.s32.totalorder %s108, %s124
      %p126 = scmp.eq.s32.totalorder %s27, 0
      %p127 = por %p125, %p126
      %s128 = ssub.s32 %s21, %s28
      %p129 = scmp.eq.s32.totalorder %s128, 0
      %s131 = sadd.s32 %s130, 1
      %s132 = scalar_select %p129, %s130, %s131
      %p135 = pneg %p129
      %p136 = scmp.eq.s32.totalorder %s21, 1
      %p137 = por %p135, %p136
      %p138 = scmp.ne.s32.totalorder %s130, %s133
      %p139 = scmp.eq.s32.totalorder %s21, 0
      %p140 = por %p138, %p139
      %p141 = scmp.ne.s32.totalorder %s130, %s133
      %p142 = scmp.eq.s32.totalorder %s26, 1
      %p143 = por %p141, %p142
      %p144 = scmp.ne.s32.totalorder %s133, %s134
      %p145 = scmp.eq.s32.totalorder %s26, 0
      %p146 = por %p144, %p145
      %p147 = scmp.ne.s32.totalorder %s133, %s134
      %p148 = scmp.eq.s32.totalorder %s27, 1
      %p149 = por %p147, %p148
      %p151 = scmp.ne.s32.totalorder %s134, %s150
      %p152 = scmp.eq.s32.totalorder %s27, 0
      %p153 = por %p151, %p152
      %s154 = ssub.s32 %s21, %s28
      %p155 = scmp.eq.s32.totalorder %s154, 0
      %s157 = sadd.s32 %s156, 1
      %s158 = scalar_select %p155, %s156, %s157
      %p161 = pneg %p155
      %p162 = scmp.eq.s32.totalorder %s21, 1
      %p163 = por %p161, %p162
      %p164 = scmp.ne.s32.totalorder %s156, %s159
      %p165 = scmp.eq.s32.totalorder %s21, 0
      %p166 = por %p164, %p165
      %p167 = scmp.ne.s32.totalorder %s156, %s159
      %p168 = scmp.eq.s32.totalorder %s26, 1
      %p169 = por %p167, %p168
      %p170 = scmp.ne.s32.totalorder %s159, %s160
      %p171 = scmp.eq.s32.totalorder %s26, 0
      %p172 = por %p170, %p171
      %p173 = scmp.ne.s32.totalorder %s159, %s160
      %p174 = scmp.eq.s32.totalorder %s27, 1
      %p175 = por %p173, %p174
      %p177 = scmp.ne.s32.totalorder %s160, %s176
      %p178 = scmp.eq.s32.totalorder %s27, 0
      %p179 = por %p177, %p178
      %p180 = scmp.le.s32.totalorder 1, %s21
      %p181 = scmp.lt.s32.totalorder %s21, 3
      %p182 = pnand %p180, %p181
      %p183 = pneg %p182
      // Predicated region
      $region9: #{_d2l_tensor_path.2} parent=5 // pred_check
        _
      $region10: #{_d2l_tensor_path.2} parent=5 // pred_check_branch
        %185 = sbr.rel (%p182) target = $region12
      $region11: #{_d2l_tensor_path.2} parent=5 // pred_region
        %s186 = ssub.s32 %s21, 1
        // Predicated region
        $region13: #{_d2l_tensor_path.2} parent=11 // pred_check
          %p187 = pneg %p68
        $region14: #{_d2l_tensor_path.2} parent=11 // pred_check_branch
          %189 = sbr.rel (%p187) target = $region16
        $region15: #{_d2l_tensor_path.2} parent=11 // pred_region
          _
        $region16: #{_d2l_tensor_path.2} parent=11 // pred_fallthru
          _
      $region12: #{_d2l_tensor_path.2} parent=5 // pred_fallthru
        _
      %p190 = scmp.lt.s32.totalorder %s21, 2
      // Predicated region
      $region17: #{_d2l_tensor_path.2} parent=5 // pred_check
        %p191 = pneg %p190
      $region18: #{_d2l_tensor_path.2} parent=5 // pred_check_branch
        %193 = sbr.rel (%p191) target = $region20
      $region19: #{_d2l_tensor_path.2} parent=5 // pred_region
        // Predicated region
        $region21: #{_d2l_tensor_path.2} parent=19 // pred_check
          %p194 = pneg %p41
        $region22: #{_d2l_tensor_path.2} parent=19 // pred_check_branch
          %196 = sbr.rel (%p194) target = $region24
        $region23: #{_d2l_tensor_path.2} parent=19 // pred_region
          %p197 = scmp.lt.s32.totalorder %s21, 1
          %s198 = scalar_select %p197, %s21, 1
          %s199 = smul.addr %s198, 128
          %s200 = smul.addr %s199, 8
          %s201 = scalar_lea.vmem %s1, %s200
        $region24: #{_d2l_tensor_path.2} parent=19 // pred_fallthru
          _
      $region20: #{_d2l_tensor_path.2} parent=5 // pred_fallthru
        _
      %p202 = scmp.le.s32.totalorder 1, %s21
      %p203 = scmp.lt.s32.totalorder %s21, 3
      %p204 = pnand %p202, %p203
      %p205 = pneg %p204
      // Predicated region
      $region25: #{_d2l_tensor_path.2} parent=5 // pred_check
        _
      $region26: #{_d2l_tensor_path.2} parent=5 // pred_check_branch
        %207 = sbr.rel (%p204) target = $region28
      $region27: #{_d2l_tensor_path.2} parent=5 // pred_region
        #allocation9 [shape = 'u8[524288]{0}', space=vmem, size = 0x80000, dematerialized = true, scoped, tag = 'FusionAdapter Buffer %fusion.1 = f32[2,8,128,128]{3,2,1,0:T(8,128)} fusion(%param_1.6), kind=kLoop, calls=%fused_computation.2.clone, metadata={op_name="jit(_d2l_tensor_path)/jit(_take)/gather" stack_frame_id=10}']
        %s208 = ssub.s32 %s21, 1
        %p209 = scmp.lt.s32.totalorder %s26, 1
        %s210 = scalar_select %p209, %s26, 1
        %s211 = smul.addr %s210, 128
        %s212 = smul.addr %s211, 8
        %s213 = scalar_lea.vmem %s1, %s212
        %p214 = pneg %p47
        %p215 = pneg %p44
        %p216 = pneg %p68
        %p217 = pneg %p65
        %p218 = pneg %p94
        %p219 = pneg %p91
        %s220 = sand.u32 %s81, 1
        %s221 = scalar_lea.sflag [#allocation3], %s220
        %s222 = sand.u32 %s81, 1
        %s223 = smul.addr %s222, 32
        %s224 = scalar_lea.vmem [#allocation2], %s223
        %p225 = pneg %p120
        %p226 = pneg %p117
        %s227 = sand.u32 %s26, 1
        %s228 = scalar_lea.sflag [#allocation5], %s227
        %s229 = sand.u32 %s107, 1
        %s230 = smul.addr %s229, 128
        %s231 = scalar_lea.vmem [#allocation4], %s230
        %p232 = pneg %p146
        %p233 = pneg %p143
        %s234 = sand.u32 %s26, 1
        %s235 = scalar_lea.sflag [#allocation5], %s234
        %s236 = sand.u32 %s133, 1
        %s237 = smul.addr %s236, 128
        %s238 = scalar_lea.vmem [#allocation6], %s237
        %p239 = pneg %p172
        %p240 = pneg %p169
        %s241 = sand.u32 %s159, 1
        %s242 = scalar_lea.sflag [#allocation8], %s241
        %s243 = sand.u32 %s159, 1
        %s244 = scalar_lea.vmem [#allocation7], %s243
        %p245 = scmp.lt.s32.totalorder %s26, 1
        %s246 = scalar_select %p245, %s26, 1
        %s247 = smul.addr %s246, 128
        %s248 = smul.addr %s247, 8
        %s249 = scalar_lea.vmem %s1, %s248
        %v250 = vld [vmem:[%s249] sm:$0xff]
        %252 = vst [vmem:[#allocation9] sm:$0xff] %v250
        %s253 = scalar_lea.vmem %s249, 8
        %v254 = vld [vmem:[%s253] sm:$0xff]
        %s255 = scalar_lea.vmem [#allocation9], 8
        %257 = vst [vmem:[%s255] sm:$0xff] %v254
        %s258 = scalar_lea.vmem %s249, 16
        %v259 = vld [vmem:[%s258] sm:$0xff]
        %s260 = scalar_lea.vmem [#allocation9], 16
        %262 = vst [vmem:[%s260] sm:$0xff] %v259
        %s263 = scalar_lea.vmem %s249, 24
        %v264 = vld [vmem:[%s263] sm:$0xff]
        %s265 = scalar_lea.vmem [#allocation9], 24
        %267 = vst [vmem:[%s265] sm:$0xff] %v264
        %s268 = scalar_lea.vmem %s249, 32
        %v269 = vld [vmem:[%s268] sm:$0xff]
        %s270 = scalar_lea.vmem [#allocation9], 32
        %272 = vst [vmem:[%s270] sm:$0xff] %v269
        %s273 = scalar_lea.vmem %s249, 40
        %v274 = vld [vmem:[%s273] sm:$0xff]
        %s275 = scalar_lea.vmem [#allocation9], 40
        %277 = vst [vmem:[%s275] sm:$0xff] %v274
        %s278 = scalar_lea.vmem %s249, 48
        %v279 = vld [vmem:[%s278] sm:$0xff]
        %s280 = scalar_lea.vmem [#allocation9], 48
        %282 = vst [vmem:[%s280] sm:$0xff] %v279
        %s283 = scalar_lea.vmem %s249, 56
        %v284 = vld [vmem:[%s283] sm:$0xff]
        %s285 = scalar_lea.vmem [#allocation9], 56
        %287 = vst [vmem:[%s285] sm:$0xff] %v284
        %s288 = scalar_lea.vmem %s249, 64
        %v289 = vld [vmem:[%s288] sm:$0xff]
        %s290 = scalar_lea.vmem [#allocation9], 64
        %292 = vst [vmem:[%s290] sm:$0xff] %v289
        %s293 = scalar_lea.vmem %s249, 72
        %v294 = vld [vmem:[%s293] sm:$0xff]
        %s295 = scalar_lea.vmem [#allocation9], 72
        %297 = vst [vmem:[%s295] sm:$0xff] %v294
        %s298 = scalar_lea.vmem %s249, 80
        %v299 = vld [vmem:[%s298] sm:$0xff]
        %s300 = scalar_lea.vmem [#allocation9], 80
        %302 = vst [vmem:[%s300] sm:$0xff] %v299
        %s303 = scalar_lea.vmem %s249, 88
        %v304 = vld [vmem:[%s303] sm:$0xff]
        %s305 = scalar_lea.vmem [#allocation9], 88
        %307 = vst [vmem:[%s305] sm:$0xff] %v304
        %s308 = scalar_lea.vmem %s249, 96
        %v309 = vld [vmem:[%s308] sm:$0xff]
        %s310 = scalar_lea.vmem [#allocation9], 96
        %312 = vst [vmem:[%s310] sm:$0xff] %v309
        %s313 = scalar_lea.vmem %s249, 104
        %v314 = vld [vmem:[%s313] sm:$0xff]
        %s315 = scalar_lea.vmem [#allocation9], 104
        %317 = vst [vmem:[%s315] sm:$0xff] %v314
        %s318 = scalar_lea.vmem %s249, 112
        %v319 = vld [vmem:[%s318] sm:$0xff]
        %s320 = scalar_lea.vmem [#allocation9], 112
        %322 = vst [vmem:[%s320] sm:$0xff] %v319
        %s323 = scalar_lea.vmem %s249, 120
        %v324 = vld [vmem:[%s323] sm:$0xff]
        %s325 = scalar_lea.vmem [#allocation9], 120
        %327 = vst [vmem:[%s325] sm:$0xff] %v324
        %s328 = scalar_lea.vmem %s249, 128
        %v329 = vld [vmem:[%s328] sm:$0xff]
        %s330 = scalar_lea.vmem [#allocation9], 128
        %332 = vst [vmem:[%s330] sm:$0xff] %v329
        %s333 = scalar_lea.vmem %s249, 136
        %v334 = vld [vmem:[%s333] sm:$0xff]
        %s335 = scalar_lea.vmem [#allocation9], 136
        %337 = vst [vmem:[%s335] sm:$0xff] %v334
        %s338 = scalar_lea.vmem %s249, 144
        %v339 = vld [vmem:[%s338] sm:$0xff]
        %s340 = scalar_lea.vmem [#allocation9], 144
        %342 = vst [vmem:[%s340] sm:$0xff] %v339
        %s343 = scalar_lea.vmem %s249, 152
        %v344 = vld [vmem:[%s343] sm:$0xff]
        %s345 = scalar_lea.vmem [#allocation9], 152
        %347 = vst [vmem:[%s345] sm:$0xff] %v344
        %s348 = scalar_lea.vmem %s249, 160
        %v349 = vld [vmem:[%s348] sm:$0xff]
        %s350 = scalar_lea.vmem [#allocation9], 160
        %352 = vst [vmem:[%s350] sm:$0xff] %v349
        %s353 = scalar_lea.vmem %s249, 168
        %v354 = vld [vmem:[%s353] sm:$0xff]
        %s355 = scalar_lea.vmem [#allocation9], 168
        %357 = vst [vmem:[%s355] sm:$0xff] %v354
        %s358 = scalar_lea.vmem %s249, 176
        %v359 = vld [vmem:[%s358] sm:$0xff]
        %s360 = scalar_lea.vmem [#allocation9], 176
        %362 = vst [vmem:[%s360] sm:$0xff] %v359
        %s363 = scalar_lea.vmem %s249, 184
        %v364 = vld [vmem:[%s363] sm:$0xff]
        %s365 = scalar_lea.vmem [#allocation9], 184
        %367 = vst [vmem:[%s365] sm:$0xff] %v364
        %s368 = scalar_lea.vmem %s249, 192
        %v369 = vld [vmem:[%s368] sm:$0xff]
        %s370 = scalar_lea.vmem [#allocation9], 192
        %372 = vst [vmem:[%s370] sm:$0xff] %v369
        %s373 = scalar_lea.vmem %s249, 200
        %v374 = vld [vmem:[%s373] sm:$0xff]
        %s375 = scalar_lea.vmem [#allocation9], 200
        %377 = vst [vmem:[%s375] sm:$0xff] %v374
        %s378 = scalar_lea.vmem %s249, 208
        %v379 = vld [vmem:[%s378] sm:$0xff]
        %s380 = scalar_lea.vmem [#allocation9], 208
        %382 = vst [vmem:[%s380] sm:$0xff] %v379
        %s383 = scalar_lea.vmem %s249, 216
        %v384 = vld [vmem:[%s383] sm:$0xff]
        %s385 = scalar_lea.vmem [#allocation9], 216
        %387 = vst [vmem:[%s385] sm:$0xff] %v384
        %s388 = scalar_lea.vmem %s249, 224
        %v389 = vld [vmem:[%s388] sm:$0xff]
        %s390 = scalar_lea.vmem [#allocation9], 224
        %392 = vst [vmem:[%s390] sm:$0xff] %v389
        %s393 = scalar_lea.vmem %s249, 232
        %v394 = vld [vmem:[%s393] sm:$0xff]
        %s395 = scalar_lea.vmem [#allocation9], 232
        %397 = vst [vmem:[%s395] sm:$0xff] %v394
        %s398 = scalar_lea.vmem %s249, 240
        %v399 = vld [vmem:[%s398] sm:$0xff]
        %s400 = scalar_lea.vmem [#allocation9], 240
        %402 = vst [vmem:[%s400] sm:$0xff] %v399
        %s403 = scalar_lea.vmem %s249, 248
        %v404 = vld [vmem:[%s403] sm:$0xff]
        %s405 = scalar_lea.vmem [#allocation9], 248
        %407 = vst [vmem:[%s405] sm:$0xff] %v404
        %s408 = scalar_lea.vmem %s249, 256
        %v409 = vld [vmem:[%s408] sm:$0xff]
        %s410 = scalar_lea.vmem [#allocation9], 256
        %412 = vst [vmem:[%s410] sm:$0xff] %v409
        %s413 = scalar_lea.vmem %s249, 264
        %v414 = vld [vmem:[%s413] sm:$0xff]
        %s415 = scalar_lea.vmem [#allocation9], 264
        %417 = vst [vmem:[%s415] sm:$0xff] %v414
        %s418 = scalar_lea.vmem %s249, 272
        %v419 = vld [vmem:[%s418] sm:$0xff]
        %s420 = scalar_lea.vmem [#allocation9], 272
        %422 = vst [vmem:[%s420] sm:$0xff] %v419
        %s423 = scalar_lea.vmem %s249, 280
        %v424 = vld [vmem:[%s423] sm:$0xff]
        %s425 = scalar_lea.vmem [#allocation9], 280
        %427 = vst [vmem:[%s425] sm:$0xff] %v424
        %s428 = scalar_lea.vmem %s249, 288
        %v429 = vld [vmem:[%s428] sm:$0xff]
        %s430 = scalar_lea.vmem [#allocation9], 288
        %432 = vst [vmem:[%s430] sm:$0xff] %v429
        %s433 = scalar_lea.vmem %s249, 296
        %v434 = vld [vmem:[%s433] sm:$0xff]
        %s435 = scalar_lea.vmem [#allocation9], 296
        %437 = vst [vmem:[%s435] sm:$0xff] %v434
        %s438 = scalar_lea.vmem %s249, 304
        %v439 = vld [vmem:[%s438] sm:$0xff]
        %s440 = scalar_lea.vmem [#allocation9], 304
        %442 = vst [vmem:[%s440] sm:$0xff] %v439
        %s443 = scalar_lea.vmem %s249, 312
        %v444 = vld [vmem:[%s443] sm:$0xff]
        %s445 = scalar_lea.vmem [#allocation9], 312
        %447 = vst [vmem:[%s445] sm:$0xff] %v444
        %s448 = scalar_lea.vmem %s249, 320
        %v449 = vld [vmem:[%s448] sm:$0xff]
        %s450 = scalar_lea.vmem [#allocation9], 320
        %452 = vst [vmem:[%s450] sm:$0xff] %v449
        %s453 = scalar_lea.vmem %s249, 328
        %v454 = vld [vmem:[%s453] sm:$0xff]
        %s455 = scalar_lea.vmem [#allocation9], 328
        %457 = vst [vmem:[%s455] sm:$0xff] %v454
        %s458 = scalar_lea.vmem %s249, 336
        %v459 = vld [vmem:[%s458] sm:$0xff]
        %s460 = scalar_lea.vmem [#allocation9], 336
        %462 = vst [vmem:[%s460] sm:$0xff] %v459
        %s463 = scalar_lea.vmem %s249, 344
        %v464 = vld [vmem:[%s463] sm:$0xff]
        %s465 = scalar_lea.vmem [#allocation9], 344
        %467 = vst [vmem:[%s465] sm:$0xff] %v464
        %s468 = scalar_lea.vmem %s249, 352
        %v469 = vld [vmem:[%s468] sm:$0xff]
        %s470 = scalar_lea.vmem [#allocation9], 352
        %472 = vst [vmem:[%s470] sm:$0xff] %v469
        %s473 = scalar_lea.vmem %s249, 360
        %v474 = vld [vmem:[%s473] sm:$0xff]
        %s475 = scalar_lea.vmem [#allocation9], 360
        %477 = vst [vmem:[%s475] sm:$0xff] %v474
        %s478 = scalar_lea.vmem %s249, 368
        %v479 = vld [vmem:[%s478] sm:$0xff]
        %s480 = scalar_lea.vmem [#allocation9], 368
        %482 = vst [vmem:[%s480] sm:$0xff] %v479
        %s483 = scalar_lea.vmem %s249, 376
        %v484 = vld [vmem:[%s483] sm:$0xff]
        %s485 = scalar_lea.vmem [#allocation9], 376
        %487 = vst [vmem:[%s485] sm:$0xff] %v484
        %s488 = scalar_lea.vmem %s249, 384
        %v489 = vld [vmem:[%s488] sm:$0xff]
        %s490 = scalar_lea.vmem [#allocation9], 384
        %492 = vst [vmem:[%s490] sm:$0xff] %v489
        %s493 = scalar_lea.vmem %s249, 392
        %v494 = vld [vmem:[%s493] sm:$0xff]
        %s495 = scalar_lea.vmem [#allocation9], 392
        %497 = vst [vmem:[%s495] sm:$0xff] %v494
        %s498 = scalar_lea.vmem %s249, 400
        %v499 = vld [vmem:[%s498] sm:$0xff]
        %s500 = scalar_lea.vmem [#allocation9], 400
        %502 = vst [vmem:[%s500] sm:$0xff] %v499
        %s503 = scalar_lea.vmem %s249, 408
        %v504 = vld [vmem:[%s503] sm:$0xff]
        %s505 = scalar_lea.vmem [#allocation9], 408
        %507 = vst [vmem:[%s505] sm:$0xff] %v504
        %s508 = scalar_lea.vmem %s249, 416
        %v509 = vld [vmem:[%s508] sm:$0xff]
        %s510 = scalar_lea.vmem [#allocation9], 416
        %512 = vst [vmem:[%s510] sm:$0xff] %v509
        %s513 = scalar_lea.vmem %s249, 424
        %v514 = vld [vmem:[%s513] sm:$0xff]
        %s515 = scalar_lea.vmem [#allocation9], 424
        %517 = vst [vmem:[%s515] sm:$0xff] %v514
        %s518 = scalar_lea.vmem %s249, 432
        %v519 = vld [vmem:[%s518] sm:$0xff]
        %s520 = scalar_lea.vmem [#allocation9], 432
        %522 = vst [vmem:[%s520] sm:$0xff] %v519
        %s523 = scalar_lea.vmem %s249, 440
        %v524 = vld [vmem:[%s523] sm:$0xff]
        %s525 = scalar_lea.vmem [#allocation9], 440
        %527 = vst [vmem:[%s525] sm:$0xff] %v524
        %s528 = scalar_lea.vmem %s249, 448
        %v529 = vld [vmem:[%s528] sm:$0xff]
        %s530 = scalar_lea.vmem [#allocation9], 448
        %532 = vst [vmem:[%s530] sm:$0xff] %v529
        %s533 = scalar_lea.vmem %s249, 456
        %v534 = vld [vmem:[%s533] sm:$0xff]
        %s535 = scalar_lea.vmem [#allocation9], 456
        %537 = vst [vmem:[%s535] sm:$0xff] %v534
        %s538 = scalar_lea.vmem %s249, 464
        %v539 = vld [vmem:[%s538] sm:$0xff]
        %s540 = scalar_lea.vmem [#allocation9], 464
        %542 = vst [vmem:[%s540] sm:$0xff] %v539
        %s543 = scalar_lea.vmem %s249, 472
        %v544 = vld [vmem:[%s543] sm:$0xff]
        %s545 = scalar_lea.vmem [#allocation9], 472
        %547 = vst [vmem:[%s545] sm:$0xff] %v544
        %s548 = scalar_lea.vmem %s249, 480
        %v549 = vld [vmem:[%s548] sm:$0xff]
        %s550 = scalar_lea.vmem [#allocation9], 480
        %552 = vst [vmem:[%s550] sm:$0xff] %v549
        %s553 = scalar_lea.vmem %s249, 488
        %v554 = vld [vmem:[%s553] sm:$0xff]
        %s555 = scalar_lea.vmem [#allocation9], 488
        %557 = vst [vmem:[%s555] sm:$0xff] %v554
        %s558 = scalar_lea.vmem %s249, 496
        %v559 = vld [vmem:[%s558] sm:$0xff]
        %s560 = scalar_lea.vmem [#allocation9], 496
        %562 = vst [vmem:[%s560] sm:$0xff] %v559
        %s563 = scalar_lea.vmem %s249, 504
        %v564 = vld [vmem:[%s563] sm:$0xff]
        %s565 = scalar_lea.vmem [#allocation9], 504
        %567 = vst [vmem:[%s565] sm:$0xff] %v564
        %s568 = scalar_lea.vmem %s249, 512
        %v569 = vld [vmem:[%s568] sm:$0xff]
        %s570 = scalar_lea.vmem [#allocation9], 512
        %572 = vst [vmem:[%s570] sm:$0xff] %v569
        %s573 = scalar_lea.vmem %s249, 520
        %v574 = vld [vmem:[%s573] sm:$0xff]
        %s575 = scalar_lea.vmem [#allocation9], 520
        %577 = vst [vmem:[%s575] sm:$0xff] %v574
        %s578 = scalar_lea.vmem %s249, 528
        %v579 = vld [vmem:[%s578] sm:$0xff]
        %s580 = scalar_lea.vmem [#allocation9], 528
        %582 = vst [vmem:[%s580] sm:$0xff] %v579
        %s583 = scalar_lea.vmem %s249, 536
        %v584 = vld [vmem:[%s583] sm:$0xff]
        %s585 = scalar_lea.vmem [#allocation9], 536
        %587 = vst [vmem:[%s585] sm:$0xff] %v584
        %s588 = scalar_lea.vmem %s249, 544
        %v589 = vld [vmem:[%s588] sm:$0xff]
        %s590 = scalar_lea.vmem [#allocation9], 544
        %592 = vst [vmem:[%s590] sm:$0xff] %v589
        %s593 = scalar_lea.vmem %s249, 552
        %v594 = vld [vmem:[%s593] sm:$0xff]
        %s595 = scalar_lea.vmem [#allocation9], 552
        %597 = vst [vmem:[%s595] sm:$0xff] %v594
        %s598 = scalar_lea.vmem %s249, 560
        %v599 = vld [vmem:[%s598] sm:$0xff]
        %s600 = scalar_lea.vmem [#allocation9], 560
        %602 = vst [vmem:[%s600] sm:$0xff] %v599
        %s603 = scalar_lea.vmem %s249, 568
        %v604 = vld [vmem:[%s603] sm:$0xff]
        %s605 = scalar_lea.vmem [#allocation9], 568
        %607 = vst [vmem:[%s605] sm:$0xff] %v604
        %s608 = scalar_lea.vmem %s249, 576
        %v609 = vld [vmem:[%s608] sm:$0xff]
        %s610 = scalar_lea.vmem [#allocation9], 576
        %612 = vst [vmem:[%s610] sm:$0xff] %v609
        %s613 = scalar_lea.vmem %s249, 584
        %v614 = vld [vmem:[%s613] sm:$0xff]
        %s615 = scalar_lea.vmem [#allocation9], 584
        %617 = vst [vmem:[%s615] sm:$0xff] %v614
        %s618 = scalar_lea.vmem %s249, 592
        %v619 = vld [vmem:[%s618] sm:$0xff]
        %s620 = scalar_lea.vmem [#allocation9], 592
        %622 = vst [vmem:[%s620] sm:$0xff] %v619
        %s623 = scalar_lea.vmem %s249, 600
        %v624 = vld [vmem:[%s623] sm:$0xff]
        %s625 = scalar_lea.vmem [#allocation9], 600
        %627 = vst [vmem:[%s625] sm:$0xff] %v624
        %s628 = scalar_lea.vmem %s249, 608
        %v629 = vld [vmem:[%s628] sm:$0xff]
        %s630 = scalar_lea.vmem [#allocation9], 608
        %632 = vst [vmem:[%s630] sm:$0xff] %v629
        %s633 = scalar_lea.vmem %s249, 616
        %v634 = vld [vmem:[%s633] sm:$0xff]
        %s635 = scalar_lea.vmem [#allocation9], 616
        %637 = vst [vmem:[%s635] sm:$0xff] %v634
        %s638 = scalar_lea.vmem %s249, 624
        %v639 = vld [vmem:[%s638] sm:$0xff]
        %s640 = scalar_lea.vmem [#allocation9], 624
        %642 = vst [vmem:[%s640] sm:$0xff] %v639
        %s643 = scalar_lea.vmem %s249, 632
        %v644 = vld [vmem:[%s643] sm:$0xff]
        %s645 = scalar_lea.vmem [#allocation9], 632
        %647 = vst [vmem:[%s645] sm:$0xff] %v644
        %s648 = scalar_lea.vmem %s249, 640
        %v649 = vld [vmem:[%s648] sm:$0xff]
        %s650 = scalar_lea.vmem [#allocation9], 640
        %652 = vst [vmem:[%s650] sm:$0xff] %v649
        %s653 = scalar_lea.vmem %s249, 648
        %v654 = vld [vmem:[%s653] sm:$0xff]
        %s655 = scalar_lea.vmem [#allocation9], 648
        %657 = vst [vmem:[%s655] sm:$0xff] %v654
        %s658 = scalar_lea.vmem %s249, 656
        %v659 = vld [vmem:[%s658] sm:$0xff]
        %s660 = scalar_lea.vmem [#allocation9], 656
        %662 = vst [vmem:[%s660] sm:$0xff] %v659
        %s663 = scalar_lea.vmem %s249, 664
        %v664 = vld [vmem:[%s663] sm:$0xff]
        %s665 = scalar_lea.vmem [#allocation9], 664
        %667 = vst [vmem:[%s665] sm:$0xff] %v664
        %s668 = scalar_lea.vmem %s249, 672
        %v669 = vld [vmem:[%s668] sm:$0xff]
        %s670 = scalar_lea.vmem [#allocation9], 672
        %672 = vst [vmem:[%s670] sm:$0xff] %v669
        %s673 = scalar_lea.vmem %s249, 680
        %v674 = vld [vmem:[%s673] sm:$0xff]
        %s675 = scalar_lea.vmem [#allocation9], 680
        %677 = vst [vmem:[%s675] sm:$0xff] %v674
        %s678 = scalar_lea.vmem %s249, 688
        %v679 = vld [vmem:[%s678] sm:$0xff]
        %s680 = scalar_lea.vmem [#allocation9], 688
        %682 = vst [vmem:[%s680] sm:$0xff] %v679
        %s683 = scalar_lea.vmem %s249, 696
        %v684 = vld [vmem:[%s683] sm:$0xff]
        %s685 = scalar_lea.vmem [#allocation9], 696
        %687 = vst [vmem:[%s685] sm:$0xff] %v684
        %s688 = scalar_lea.vmem %s249, 704
        %v689 = vld [vmem:[%s688] sm:$0xff]
        %s690 = scalar_lea.vmem [#allocation9], 704
        %692 = vst [vmem:[%s690] sm:$0xff] %v689
        %s693 = scalar_lea.vmem %s249, 712
        %v694 = vld [vmem:[%s693] sm:$0xff]
        %s695 = scalar_lea.vmem [#allocation9], 712
        %697 = vst [vmem:[%s695] sm:$0xff] %v694
        %s698 = scalar_lea.vmem %s249, 720
        %v699 = vld [vmem:[%s698] sm:$0xff]
        %s700 = scalar_lea.vmem [#allocation9], 720
        %702 = vst [vmem:[%s700] sm:$0xff] %v699
        %s703 = scalar_lea.vmem %s249, 728
        %v704 = vld [vmem:[%s703] sm:$0xff]
        %s705 = scalar_lea.vmem [#allocation9], 728
        %707 = vst [vmem:[%s705] sm:$0xff] %v704
        %s708 = scalar_lea.vmem %s249, 736
        %v709 = vld [vmem:[%s708] sm:$0xff]
        %s710 = scalar_lea.vmem [#allocation9], 736
        %712 = vst [vmem:[%s710] sm:$0xff] %v709
        %s713 = scalar_lea.vmem %s249, 744
        %v714 = vld [vmem:[%s713] sm:$0xff]
        %s715 = scalar_lea.vmem [#allocation9], 744
        %717 = vst [vmem:[%s715] sm:$0xff] %v714
        %s718 = scalar_lea.vmem %s249, 752
        %v719 = vld [vmem:[%s718] sm:$0xff]
        %s720 = scalar_lea.vmem [#allocation9], 752
        %722 = vst [vmem:[%s720] sm:$0xff] %v719
        %s723 = scalar_lea.vmem %s249, 760
        %v724 = vld [vmem:[%s723] sm:$0xff]
        %s725 = scalar_lea.vmem [#allocation9], 760
        %727 = vst [vmem:[%s725] sm:$0xff] %v724
        %s728 = scalar_lea.vmem %s249, 768
        %v729 = vld [vmem:[%s728] sm:$0xff]
        %s730 = scalar_lea.vmem [#allocation9], 768
        %732 = vst [vmem:[%s730] sm:$0xff] %v729
        %s733 = scalar_lea.vmem %s249, 776
        %v734 = vld [vmem:[%s733] sm:$0xff]
        %s735 = scalar_lea.vmem [#allocation9], 776
        %737 = vst [vmem:[%s735] sm:$0xff] %v734
        %s738 = scalar_lea.vmem %s249, 784
        %v739 = vld [vmem:[%s738] sm:$0xff]
        %s740 = scalar_lea.vmem [#allocation9], 784
        %742 = vst [vmem:[%s740] sm:$0xff] %v739
        %s743 = scalar_lea.vmem %s249, 792
        %v744 = vld [vmem:[%s743] sm:$0xff]
        %s745 = scalar_lea.vmem [#allocation9], 792
        %747 = vst [vmem:[%s745] sm:$0xff] %v744
        %s748 = scalar_lea.vmem %s249, 800
        %v749 = vld [vmem:[%s748] sm:$0xff]
        %s750 = scalar_lea.vmem [#allocation9], 800
        %752 = vst [vmem:[%s750] sm:$0xff] %v749
        %s753 = scalar_lea.vmem %s249, 808
        %v754 = vld [vmem:[%s753] sm:$0xff]
        %s755 = scalar_lea.vmem [#allocation9], 808
        %757 = vst [vmem:[%s755] sm:$0xff] %v754
        %s758 = scalar_lea.vmem %s249, 816
        %v759 = vld [vmem:[%s758] sm:$0xff]
        %s760 = scalar_lea.vmem [#allocation9], 816
        %762 = vst [vmem:[%s760] sm:$0xff] %v759
        %s763 = scalar_lea.vmem %s249, 824
        %v764 = vld [vmem:[%s763] sm:$0xff]
        %s765 = scalar_lea.vmem [#allocation9], 824
        %767 = vst [vmem:[%s765] sm:$0xff] %v764
        %s768 = scalar_lea.vmem %s249, 832
        %v769 = vld [vmem:[%s768] sm:$0xff]
        %s770 = scalar_lea.vmem [#allocation9], 832
        %772 = vst [vmem:[%s770] sm:$0xff] %v769
        %s773 = scalar_lea.vmem %s249, 840
        %v774 = vld [vmem:[%s773] sm:$0xff]
        %s775 = scalar_lea.vmem [#allocation9], 840
        %777 = vst [vmem:[%s775] sm:$0xff] %v774
        %s778 = scalar_lea.vmem %s249, 848
        %v779 = vld [vmem:[%s778] sm:$0xff]
        %s780 = scalar_lea.vmem [#allocation9], 848
        %782 = vst [vmem:[%s780] sm:$0xff] %v779
        %s783 = scalar_lea.vmem %s249, 856
        %v784 = vld [vmem:[%s783] sm:$0xff]
        %s785 = scalar_lea.vmem [#allocation9], 856
        %787 = vst [vmem:[%s785] sm:$0xff] %v784
        %s788 = scalar_lea.vmem %s249, 864
        %v789 = vld [vmem:[%s788] sm:$0xff]
        %s790 = scalar_lea.vmem [#allocation9], 864
        %792 = vst [vmem:[%s790] sm:$0xff] %v789
        %s793 = scalar_lea.vmem %s249, 872
        %v794 = vld [vmem:[%s793] sm:$0xff]
        %s795 = scalar_lea.vmem [#allocation9], 872
        %797 = vst [vmem:[%s795] sm:$0xff] %v794
        %s798 = scalar_lea.vmem %s249, 880
        %v799 = vld [vmem:[%s798] sm:$0xff]
        %s800 = scalar_lea.vmem [#allocation9], 880
        %802 = vst [vmem:[%s800] sm:$0xff] %v799
        %s803 = scalar_lea.vmem %s249, 888
        %v804 = vld [vmem:[%s803] sm:$0xff]
        %s805 = scalar_lea.vmem [#allocation9], 888
        %807 = vst [vmem:[%s805] sm:$0xff] %v804
        %s808 = scalar_lea.vmem %s249, 896
        %v809 = vld [vmem:[%s808] sm:$0xff]
        %s810 = scalar_lea.vmem [#allocation9], 896
        %812 = vst [vmem:[%s810] sm:$0xff] %v809
        %s813 = scalar_lea.vmem %s249, 904
        %v814 = vld [vmem:[%s813] sm:$0xff]
        %s815 = scalar_lea.vmem [#allocation9], 904
        %817 = vst [vmem:[%s815] sm:$0xff] %v814
        %s818 = scalar_lea.vmem %s249, 912
        %v819 = vld [vmem:[%s818] sm:$0xff]
        %s820 = scalar_lea.vmem [#allocation9], 912
        %822 = vst [vmem:[%s820] sm:$0xff] %v819
        %s823 = scalar_lea.vmem %s249, 920
        %v824 = vld [vmem:[%s823] sm:$0xff]
        %s825 = scalar_lea.vmem [#allocation9], 920
        %827 = vst [vmem:[%s825] sm:$0xff] %v824
        %s828 = scalar_lea.vmem %s249, 928
        %v829 = vld [vmem:[%s828] sm:$0xff]
        %s830 = scalar_lea.vmem [#allocation9], 928
        %832 = vst [vmem:[%s830] sm:$0xff] %v829
        %s833 = scalar_lea.vmem %s249, 936
        %v834 = vld [vmem:[%s833] sm:$0xff]
        %s835 = scalar_lea.vmem [#allocation9], 936
        %837 = vst [vmem:[%s835] sm:$0xff] %v834
        %s838 = scalar_lea.vmem %s249, 944
        %v839 = vld [vmem:[%s838] sm:$0xff]
        %s840 = scalar_lea.vmem [#allocation9], 944
        %842 = vst [vmem:[%s840] sm:$0xff] %v839
        %s843 = scalar_lea.vmem %s249, 952
        %v844 = vld [vmem:[%s843] sm:$0xff]
        %s845 = scalar_lea.vmem [#allocation9], 952
        %847 = vst [vmem:[%s845] sm:$0xff] %v844
        %s848 = scalar_lea.vmem %s249, 960
        %v849 = vld [vmem:[%s848] sm:$0xff]
        %s850 = scalar_lea.vmem [#allocation9], 960
        %852 = vst [vmem:[%s850] sm:$0xff] %v849
        %s853 = scalar_lea.vmem %s249, 968
        %v854 = vld [vmem:[%s853] sm:$0xff]
        %s855 = scalar_lea.vmem [#allocation9], 968
        %857 = vst [vmem:[%s855] sm:$0xff] %v854
        %s858 = scalar_lea.vmem %s249, 976
        %v859 = vld [vmem:[%s858] sm:$0xff]
        %s860 = scalar_lea.vmem [#allocation9], 976
        %862 = vst [vmem:[%s860] sm:$0xff] %v859
        %s863 = scalar_lea.vmem %s249, 984
        %v864 = vld [vmem:[%s863] sm:$0xff]
        %s865 = scalar_lea.vmem [#allocation9], 984
        %867 = vst [vmem:[%s865] sm:$0xff] %v864
        %s868 = scalar_lea.vmem %s249, 992
        %v869 = vld [vmem:[%s868] sm:$0xff]
        %s870 = scalar_lea.vmem [#allocation9], 992
        %872 = vst [vmem:[%s870] sm:$0xff] %v869
        %s873 = scalar_lea.vmem %s249, 1000
        %v874 = vld [vmem:[%s873] sm:$0xff]
        %s875 = scalar_lea.vmem [#allocation9], 1000
        %877 = vst [vmem:[%s875] sm:$0xff] %v874
        %s878 = scalar_lea.vmem %s249, 1008
        %v879 = vld [vmem:[%s878] sm:$0xff]
        %s880 = scalar_lea.vmem [#allocation9], 1008
        %882 = vst [vmem:[%s880] sm:$0xff] %v879
        %s883 = scalar_lea.vmem %s249, 1016
        %v884 = vld [vmem:[%s883] sm:$0xff]
        %s885 = scalar_lea.vmem [#allocation9], 1016
        %887 = vst [vmem:[%s885] sm:$0xff] %v884
        %v890 = vld [vmem:[#allocation9] sm:$0xff]
        %v891 = vld [vmem:[#allocation9 + $0x8] sm:$0xff]
        %v892 = vld [vmem:[#allocation9 + $0x10] sm:$0xff]
        %v893 = vld [vmem:[#allocation9 + $0x18] sm:$0xff]
        %v894 = vld [vmem:[#allocation9 + $0x20] sm:$0xff]
        %v895 = vld [vmem:[#allocation9 + $0x28] sm:$0xff]
        %v896 = vld [vmem:[#allocation9 + $0x30] sm:$0xff]
        %v897 = vld [vmem:[#allocation9 + $0x38] sm:$0xff]
        %v898 = vld [vmem:[#allocation9 + $0x40] sm:$0xff]
        %v899 = vld [vmem:[#allocation9 + $0x48] sm:$0xff]
        %v900 = vld [vmem:[#allocation9 + $0x50] sm:$0xff]
        %v901 = vld [vmem:[#allocation9 + $0x58] sm:$0xff]
        %v902 = vld [vmem:[#allocation9 + $0x60] sm:$0xff]
        %v903 = vld [vmem:[#allocation9 + $0x68] sm:$0xff]
        %v904 = vld [vmem:[#allocation9 + $0x70] sm:$0xff]
        %v905 = vld [vmem:[#allocation9 + $0x78] sm:$0xff]
        %v906 = vld [vmem:[%s0] sm:$0xff]
        %v907 = vld [vmem:[%s0 + $0x8] sm:$0xff]
        %v908 = vld [vmem:[%s0 + $0x10] sm:$0xff]
        %v909 = vld [vmem:[%s0 + $0x18] sm:$0xff]
        %v910 = vld [vmem:[%s0 + $0x20] sm:$0xff]
        %v911 = vld [vmem:[%s0 + $0x28] sm:$0xff]
        %v912 = vld [vmem:[%s0 + $0x30] sm:$0xff]
        %v913 = vld [vmem:[%s0 + $0x38] sm:$0xff]
        %v914 = vld [vmem:[%s0 + $0x40] sm:$0xff]
        %v915 = vld [vmem:[%s0 + $0x48] sm:$0xff]
        %v916 = vld [vmem:[%s0 + $0x50] sm:$0xff]
        %v917 = vld [vmem:[%s0 + $0x58] sm:$0xff]
        %v918 = vld [vmem:[%s0 + $0x60] sm:$0xff]
        %v919 = vld [vmem:[%s0 + $0x68] sm:$0xff]
        %v920 = vld [vmem:[%s0 + $0x70] sm:$0xff]
        %v921 = vld [vmem:[%s0 + $0x78] sm:$0xff]
        %v922 = vmul.f32 %v890, %v906
        %v923 = vmul.f32 %v891, %v907
        %v924 = vmul.f32 %v892, %v908
        %v925 = vmul.f32 %v893, %v909
        %v926 = vmul.f32 %v894, %v910
        %v927 = vmul.f32 %v895, %v911
        %v928 = vmul.f32 %v896, %v912
        %v929 = vmul.f32 %v897, %v913
        %v930 = vmul.f32 %v898, %v914
        %v931 = vmul.f32 %v899, %v915
        %v932 = vmul.f32 %v900, %v916
        %v933 = vmul.f32 %v901, %v917
        %v934 = vmul.f32 %v902, %v918
        %v935 = vmul.f32 %v903, %v919
        %v936 = vmul.f32 %v904, %v920
        %v937 = vmul.f32 %v905, %v921
        %s938 = scalar_lea.vmem [#allocation9], 128
        %v939 = vld [vmem:[%s938] sm:$0xff]
        %v940 = vld [vmem:[%s938 + $0x8] sm:$0xff]
        %v941 = vld [vmem:[%s938 + $0x10] sm:$0xff]
        %v942 = vld [vmem:[%s938 + $0x18] sm:$0xff]
        %v943 = vld [vmem:[%s938 + $0x20] sm:$0xff]
        %v944 = vld [vmem:[%s938 + $0x28] sm:$0xff]
        %v945 = vld [vmem:[%s938 + $0x30] sm:$0xff]
        %v946 = vld [vmem:[%s938 + $0x38] sm:$0xff]
        %v947 = vld [vmem:[%s938 + $0x40] sm:$0xff]
        %v948 = vld [vmem:[%s938 + $0x48] sm:$0xff]
        %v949 = vld [vmem:[%s938 + $0x50] sm:$0xff]
        %v950 = vld [vmem:[%s938 + $0x58] sm:$0xff]
        %v951 = vld [vmem:[%s938 + $0x60] sm:$0xff]
        %v952 = vld [vmem:[%s938 + $0x68] sm:$0xff]
        %v953 = vld [vmem:[%s938 + $0x70] sm:$0xff]
        %v954 = vld [vmem:[%s938 + $0x78] sm:$0xff]
        %s955 = scalar_lea.vmem %s0, 128
        %v956 = vld [vmem:[%s955] sm:$0xff]
        %v957 = vld [vmem:[%s955 + $0x8] sm:$0xff]
        %v958 = vld [vmem:[%s955 + $0x10] sm:$0xff]
        %v959 = vld [vmem:[%s955 + $0x18] sm:$0xff]
        %v960 = vld [vmem:[%s955 + $0x20] sm:$0xff]
        %v961 = vld [vmem:[%s955 + $0x28] sm:$0xff]
        %v962 = vld [vmem:[%s955 + $0x30] sm:$0xff]
        %v963 = vld [vmem:[%s955 + $0x38] sm:$0xff]
        %v964 = vld [vmem:[%s955 + $0x40] sm:$0xff]
        %v965 = vld [vmem:[%s955 + $0x48] sm:$0xff]
        %v966 = vld [vmem:[%s955 + $0x50] sm:$0xff]
        %v967 = vld [vmem:[%s955 + $0x58] sm:$0xff]
        %v968 = vld [vmem:[%s955 + $0x60] sm:$0xff]
        %v969 = vld [vmem:[%s955 + $0x68] sm:$0xff]
        %v970 = vld [vmem:[%s955 + $0x70] sm:$0xff]
        %v971 = vld [vmem:[%s955 + $0x78] sm:$0xff]
        %v972 = vmul.f32 %v939, %v956
        %v973 = vmul.f32 %v940, %v957
        %v974 = vmul.f32 %v941, %v958
        %v975 = vmul.f32 %v942, %v959
        %v976 = vmul.f32 %v943, %v960
        %v977 = vmul.f32 %v944, %v961
        %v978 = vmul.f32 %v945, %v962
        %v979 = vmul.f32 %v946, %v963
        %v980 = vmul.f32 %v947, %v964
        %v981 = vmul.f32 %v948, %v965
        %v982 = vmul.f32 %v949, %v966
        %v983 = vmul.f32 %v950, %v967
        %v984 = vmul.f32 %v951, %v968
        %v985 = vmul.f32 %v952, %v969
        %v986 = vmul.f32 %v953, %v970
        %v987 = vmul.f32 %v954, %v971
        %v988 = vadd.f32 %v922, %v972
        %v989 = vadd.f32 %v923, %v973
        %v990 = vadd.f32 %v924, %v974
        %v991 = vadd.f32 %v925, %v975
        %v992 = vadd.f32 %v926, %v976
        %v993 = vadd.f32 %v927, %v977
        %v994 = vadd.f32 %v928, %v978
        %v995 = vadd.f32 %v929, %v979
        %v996 = vadd.f32 %v930, %v980
        %v997 = vadd.f32 %v931, %v981
        %v998 = vadd.f32 %v932, %v982
        %v999 = vadd.f32 %v933, %v983
        %v1000 = vadd.f32 %v934, %v984
        %v1001 = vadd.f32 %v935, %v985
        %v1002 = vadd.f32 %v936, %v986
        %v1003 = vadd.f32 %v937, %v987
        %s1004 = scalar_lea.vmem [#allocation9], 256
        %v1005 = vld [vmem:[%s1004] sm:$0xff]
        %v1006 = vld [vmem:[%s1004 + $0x8] sm:$0xff]
        %v1007 = vld [vmem:[%s1004 + $0x10] sm:$0xff]
        %v1008 = vld [vmem:[%s1004 + $0x18] sm:$0xff]
        %v1009 = vld [vmem:[%s1004 + $0x20] sm:$0xff]
        %v1010 = vld [vmem:[%s1004 + $0x28] sm:$0xff]
        %v1011 = vld [vmem:[%s1004 + $0x30] sm:$0xff]
        %v1012 = vld [vmem:[%s1004 + $0x38] sm:$0xff]
        %v1013 = vld [vmem:[%s1004 + $0x40] sm:$0xff]
        %v1014 = vld [vmem:[%s1004 + $0x48] sm:$0xff]
        %v1015 = vld [vmem:[%s1004 + $0x50] sm:$0xff]
        %v1016 = vld [vmem:[%s1004 + $0x58] sm:$0xff]
        %v1017 = vld [vmem:[%s1004 + $0x60] sm:$0xff]
        %v1018 = vld [vmem:[%s1004 + $0x68] sm:$0xff]
        %v1019 = vld [vmem:[%s1004 + $0x70] sm:$0xff]
        %v1020 = vld [vmem:[%s1004 + $0x78] sm:$0xff]
        %s1021 = scalar_lea.vmem %s0, 256
        %v1022 = vld [vmem:[%s1021] sm:$0xff]
        %v1023 = vld [vmem:[%s1021 + $0x8] sm:$0xff]
        %v1024 = vld [vmem:[%s1021 + $0x10] sm:$0xff]
        %v1025 = vld [vmem:[%s1021 + $0x18] sm:$0xff]
        %v1026 = vld [vmem:[%s1021 + $0x20] sm:$0xff]
        %v1027 = vld [vmem:[%s1021 + $0x28] sm:$0xff]
        %v1028 = vld [vmem:[%s1021 + $0x30] sm:$0xff]
        %v1029 = vld [vmem:[%s1021 + $0x38] sm:$0xff]
        %v1030 = vld [vmem:[%s1021 + $0x40] sm:$0xff]
        %v1031 = vld [vmem:[%s1021 + $0x48] sm:$0xff]
        %v1032 = vld [vmem:[%s1021 + $0x50] sm:$0xff]
        %v1033 = vld [vmem:[%s1021 + $0x58] sm:$0xff]
        %v1034 = vld [vmem:[%s1021 + $0x60] sm:$0xff]
        %v1035 = vld [vmem:[%s1021 + $0x68] sm:$0xff]
        %v1036 = vld [vmem:[%s1021 + $0x70] sm:$0xff]
        %v1037 = vld [vmem:[%s1021 + $0x78] sm:$0xff]
        %v1038 = vmul.f32 %v1005, %v1022
        %v1039 = vmul.f32 %v1006, %v1023
        %v1040 = vmul.f32 %v1007, %v1024
        %v1041 = vmul.f32 %v1008, %v1025
        %v1042 = vmul.f32 %v1009, %v1026
        %v1043 = vmul.f32 %v1010, %v1027
        %v1044 = vmul.f32 %v1011, %v1028
        %v1045 = vmul.f32 %v1012, %v1029
        %v1046 = vmul.f32 %v1013, %v1030
        %v1047 = vmul.f32 %v1014, %v1031
        %v1048 = vmul.f32 %v1015, %v1032
        %v1049 = vmul.f32 %v1016, %v1033
        %v1050 = vmul.f32 %v1017, %v1034
        %v1051 = vmul.f32 %v1018, %v1035
        %v1052 = vmul.f32 %v1019, %v1036
        %v1053 = vmul.f32 %v1020, %v1037
        %v1054 = vadd.f32 %v988, %v1038
        %v1055 = vadd.f32 %v989, %v1039
        %v1056 = vadd.f32 %v990, %v1040
        %v1057 = vadd.f32 %v991, %v1041
        %v1058 = vadd.f32 %v992, %v1042
        %v1059 = vadd.f32 %v993, %v1043
        %v1060 = vadd.f32 %v994, %v1044
        %v1061 = vadd.f32 %v995, %v1045
        %v1062 = vadd.f32 %v996, %v1046
        %v1063 = vadd.f32 %v997, %v1047
        %v1064 = vadd.f32 %v998, %v1048
        %v1065 = vadd.f32 %v999, %v1049
        %v1066 = vadd.f32 %v1000, %v1050
        %v1067 = vadd.f32 %v1001, %v1051
        %v1068 = vadd.f32 %v1002, %v1052
        %v1069 = vadd.f32 %v1003, %v1053
        %s1070 = scalar_lea.vmem [#allocation9], 384
        %v1071 = vld [vmem:[%s1070] sm:$0xff]
        %v1072 = vld [vmem:[%s1070 + $0x8] sm:$0xff]
        %v1073 = vld [vmem:[%s1070 + $0x10] sm:$0xff]
        %v1074 = vld [vmem:[%s1070 + $0x18] sm:$0xff]
        %v1075 = vld [vmem:[%s1070 + $0x20] sm:$0xff]
        %v1076 = vld [vmem:[%s1070 + $0x28] sm:$0xff]
        %v1077 = vld [vmem:[%s1070 + $0x30] sm:$0xff]
        %v1078 = vld [vmem:[%s1070 + $0x38] sm:$0xff]
        %v1079 = vld [vmem:[%s1070 + $0x40] sm:$0xff]
        %v1080 = vld [vmem:[%s1070 + $0x48] sm:$0xff]
        %v1081 = vld [vmem:[%s1070 + $0x50] sm:$0xff]
        %v1082 = vld [vmem:[%s1070 + $0x58] sm:$0xff]
        %v1083 = vld [vmem:[%s1070 + $0x60] sm:$0xff]
        %v1084 = vld [vmem:[%s1070 + $0x68] sm:$0xff]
        %v1085 = vld [vmem:[%s1070 + $0x70] sm:$0xff]
        %v1086 = vld [vmem:[%s1070 + $0x78] sm:$0xff]
        %s1087 = scalar_lea.vmem %s0, 384
        %v1088 = vld [vmem:[%s1087] sm:$0xff]
        %v1089 = vld [vmem:[%s1087 + $0x8] sm:$0xff]
        %v1090 = vld [vmem:[%s1087 + $0x10] sm:$0xff]
        %v1091 = vld [vmem:[%s1087 + $0x18] sm:$0xff]
        %v1092 = vld [vmem:[%s1087 + $0x20] sm:$0xff]
        %v1093 = vld [vmem:[%s1087 + $0x28] sm:$0xff]
        %v1094 = vld [vmem:[%s1087 + $0x30] sm:$0xff]
        %v1095 = vld [vmem:[%s1087 + $0x38] sm:$0xff]
        %v1096 = vld [vmem:[%s1087 + $0x40] sm:$0xff]
        %v1097 = vld [vmem:[%s1087 + $0x48] sm:$0xff]
        %v1098 = vld [vmem:[%s1087 + $0x50] sm:$0xff]
        %v1099 = vld [vmem:[%s1087 + $0x58] sm:$0xff]
        %v1100 = vld [vmem:[%s1087 + $0x60] sm:$0xff]
        %v1101 = vld [vmem:[%s1087 + $0x68] sm:$0xff]
        %v1102 = vld [vmem:[%s1087 + $0x70] sm:$0xff]
        %v1103 = vld [vmem:[%s1087 + $0x78] sm:$0xff]
        %v1104 = vmul.f32 %v1071, %v1088
        %v1105 = vmul.f32 %v1072, %v1089
        %v1106 = vmul.f32 %v1073, %v1090
        %v1107 = vmul.f32 %v1074, %v1091
        %v1108 = vmul.f32 %v1075, %v1092
        %v1109 = vmul.f32 %v1076, %v1093
        %v1110 = vmul.f32 %v1077, %v1094
        %v1111 = vmul.f32 %v1078, %v1095
        %v1112 = vmul.f32 %v1079, %v1096
        %v1113 = vmul.f32 %v1080, %v1097
        %v1114 = vmul.f32 %v1081, %v1098
        %v1115 = vmul.f32 %v1082, %v1099
        %v1116 = vmul.f32 %v1083, %v1100
        %v1117 = vmul.f32 %v1084, %v1101
        %v1118 = vmul.f32 %v1085, %v1102
        %v1119 = vmul.f32 %v1086, %v1103
        %v1120 = vadd.f32 %v1054, %v1104
        %v1121 = vadd.f32 %v1055, %v1105
        %v1122 = vadd.f32 %v1056, %v1106
        %v1123 = vadd.f32 %v1057, %v1107
        %v1124 = vadd.f32 %v1058, %v1108
        %v1125 = vadd.f32 %v1059, %v1109
        %v1126 = vadd.f32 %v1060, %v1110
        %v1127 = vadd.f32 %v1061, %v1111
        %v1128 = vadd.f32 %v1062, %v1112
        %v1129 = vadd.f32 %v1063, %v1113
        %v1130 = vadd.f32 %v1064, %v1114
        %v1131 = vadd.f32 %v1065, %v1115
        %v1132 = vadd.f32 %v1066, %v1116
        %v1133 = vadd.f32 %v1067, %v1117
        %v1134 = vadd.f32 %v1068, %v1118
        %v1135 = vadd.f32 %v1069, %v1119
        %s1136 = scalar_lea.vmem [#allocation9], 512
        %v1137 = vld [vmem:[%s1136] sm:$0xff]
        %v1138 = vld [vmem:[%s1136 + $0x8] sm:$0xff]
        %v1139 = vld [vmem:[%s1136 + $0x10] sm:$0xff]
        %v1140 = vld [vmem:[%s1136 + $0x18] sm:$0xff]
        %v1141 = vld [vmem:[%s1136 + $0x20] sm:$0xff]
        %v1142 = vld [vmem:[%s1136 + $0x28] sm:$0xff]
        %v1143 = vld [vmem:[%s1136 + $0x30] sm:$0xff]
        %v1144 = vld [vmem:[%s1136 + $0x38] sm:$0xff]
        %v1145 = vld [vmem:[%s1136 + $0x40] sm:$0xff]
        %v1146 = vld [vmem:[%s1136 + $0x48] sm:$0xff]
        %v1147 = vld [vmem:[%s1136 + $0x50] sm:$0xff]
        %v1148 = vld [vmem:[%s1136 + $0x58] sm:$0xff]
        %v1149 = vld [vmem:[%s1136 + $0x60] sm:$0xff]
        %v1150 = vld [vmem:[%s1136 + $0x68] sm:$0xff]
        %v1151 = vld [vmem:[%s1136 + $0x70] sm:$0xff]
        %v1152 = vld [vmem:[%s1136 + $0x78] sm:$0xff]
        %s1153 = scalar_lea.vmem %s0, 512
        %v1154 = vld [vmem:[%s1153] sm:$0xff]
        %v1155 = vld [vmem:[%s1153 + $0x8] sm:$0xff]
        %v1156 = vld [vmem:[%s1153 + $0x10] sm:$0xff]
        %v1157 = vld [vmem:[%s1153 + $0x18] sm:$0xff]
        %v1158 = vld [vmem:[%s1153 + $0x20] sm:$0xff]
        %v1159 = vld [vmem:[%s1153 + $0x28] sm:$0xff]
        %v1160 = vld [vmem:[%s1153 + $0x30] sm:$0xff]
        %v1161 = vld [vmem:[%s1153 + $0x38] sm:$0xff]
        %v1162 = vld [vmem:[%s1153 + $0x40] sm:$0xff]
        %v1163 = vld [vmem:[%s1153 + $0x48] sm:$0xff]
        %v1164 = vld [vmem:[%s1153 + $0x50] sm:$0xff]
        %v1165 = vld [vmem:[%s1153 + $0x58] sm:$0xff]
        %v1166 = vld [vmem:[%s1153 + $0x60] sm:$0xff]
        %v1167 = vld [vmem:[%s1153 + $0x68] sm:$0xff]
        %v1168 = vld [vmem:[%s1153 + $0x70] sm:$0xff]
        %v1169 = vld [vmem:[%s1153 + $0x78] sm:$0xff]
        %v1170 = vmul.f32 %v1137, %v1154
        %v1171 = vmul.f32 %v1138, %v1155
        %v1172 = vmul.f32 %v1139, %v1156
        %v1173 = vmul.f32 %v1140, %v1157
        %v1174 = vmul.f32 %v1141, %v1158
        %v1175 = vmul.f32 %v1142, %v1159
        %v1176 = vmul.f32 %v1143, %v1160
        %v1177 = vmul.f32 %v1144, %v1161
        %v1178 = vmul.f32 %v1145, %v1162
        %v1179 = vmul.f32 %v1146, %v1163
        %v1180 = vmul.f32 %v1147, %v1164
        %v1181 = vmul.f32 %v1148, %v1165
        %v1182 = vmul.f32 %v1149, %v1166
        %v1183 = vmul.f32 %v1150, %v1167
        %v1184 = vmul.f32 %v1151, %v1168
        %v1185 = vmul.f32 %v1152, %v1169
        %s1186 = scalar_lea.vmem [#allocation9], 640
        %v1187 = vld [vmem:[%s1186] sm:$0xff]
        %v1188 = vld [vmem:[%s1186 + $0x8] sm:$0xff]
        %v1189 = vld [vmem:[%s1186 + $0x10] sm:$0xff]
        %v1190 = vld [vmem:[%s1186 + $0x18] sm:$0xff]
        %v1191 = vld [vmem:[%s1186 + $0x20] sm:$0xff]
        %v1192 = vld [vmem:[%s1186 + $0x28] sm:$0xff]
        %v1193 = vld [vmem:[%s1186 + $0x30] sm:$0xff]
        %v1194 = vld [vmem:[%s1186 + $0x38] sm:$0xff]
        %v1195 = vld [vmem:[%s1186 + $0x40] sm:$0xff]
        %v1196 = vld [vmem:[%s1186 + $0x48] sm:$0xff]
        %v1197 = vld [vmem:[%s1186 + $0x50] sm:$0xff]
        %v1198 = vld [vmem:[%s1186 + $0x58] sm:$0xff]
        %v1199 = vld [vmem:[%s1186 + $0x60] sm:$0xff]
        %v1200 = vld [vmem:[%s1186 + $0x68] sm:$0xff]
        %v1201 = vld [vmem:[%s1186 + $0x70] sm:$0xff]
        %v1202 = vld [vmem:[%s1186 + $0x78] sm:$0xff]
        %s1203 = scalar_lea.vmem %s0, 640
        %v1204 = vld [vmem:[%s1203] sm:$0xff]
        %v1205 = vld [vmem:[%s1203 + $0x8] sm:$0xff]
        %v1206 = vld [vmem:[%s1203 + $0x10] sm:$0xff]
        %v1207 = vld [vmem:[%s1203 + $0x18] sm:$0xff]
        %v1208 = vld [vmem:[%s1203 + $0x20] sm:$0xff]
        %v1209 = vld [vmem:[%s1203 + $0x28] sm:$0xff]
        %v1210 = vld [vmem:[%s1203 + $0x30] sm:$0xff]
        %v1211 = vld [vmem:[%s1203 + $0x38] sm:$0xff]
        %v1212 = vld [vmem:[%s1203 + $0x40] sm:$0xff]
        %v1213 = vld [vmem:[%s1203 + $0x48] sm:$0xff]
        %v1214 = vld [vmem:[%s1203 + $0x50] sm:$0xff]
        %v1215 = vld [vmem:[%s1203 + $0x58] sm:$0xff]
        %v1216 = vld [vmem:[%s1203 + $0x60] sm:$0xff]
        %v1217 = vld [vmem:[%s1203 + $0x68] sm:$0xff]
        %v1218 = vld [vmem:[%s1203 + $0x70] sm:$0xff]
        %v1219 = vld [vmem:[%s1203 + $0x78] sm:$0xff]
        %v1220 = vmul.f32 %v1187, %v1204
        %v1221 = vmul.f32 %v1188, %v1205
        %v1222 = vmul.f32 %v1189, %v1206
        %v1223 = vmul.f32 %v1190, %v1207
        %v1224 = vmul.f32 %v1191, %v1208
        %v1225 = vmul.f32 %v1192, %v1209
        %v1226 = vmul.f32 %v1193, %v1210
        %v1227 = vmul.f32 %v1194, %v1211
        %v1228 = vmul.f32 %v1195, %v1212
        %v1229 = vmul.f32 %v1196, %v1213
        %v1230 = vmul.f32 %v1197, %v1214
        %v1231 = vmul.f32 %v1198, %v1215
        %v1232 = vmul.f32 %v1199, %v1216
        %v1233 = vmul.f32 %v1200, %v1217
        %v1234 = vmul.f32 %v1201, %v1218
        %v1235 = vmul.f32 %v1202, %v1219
        %v1236 = vadd.f32 %v1170, %v1220
        %v1237 = vadd.f32 %v1171, %v1221
        %v1238 = vadd.f32 %v1172, %v1222
        %v1239 = vadd.f32 %v1173, %v1223
        %v1240 = vadd.f32 %v1174, %v1224
        %v1241 = vadd.f32 %v1175, %v1225
        %v1242 = vadd.f32 %v1176, %v1226
        %v1243 = vadd.f32 %v1177, %v1227
        %v1244 = vadd.f32 %v1178, %v1228
        %v1245 = vadd.f32 %v1179, %v1229
        %v1246 = vadd.f32 %v1180, %v1230
        %v1247 = vadd.f32 %v1181, %v1231
        %v1248 = vadd.f32 %v1182, %v1232
        %v1249 = vadd.f32 %v1183, %v1233
        %v1250 = vadd.f32 %v1184, %v1234
        %v1251 = vadd.f32 %v1185, %v1235
        %s1252 = scalar_lea.vmem [#allocation9], 768
        %v1253 = vld [vmem:[%s1252] sm:$0xff]
        %v1254 = vld [vmem:[%s1252 + $0x8] sm:$0xff]
        %v1255 = vld [vmem:[%s1252 + $0x10] sm:$0xff]
        %v1256 = vld [vmem:[%s1252 + $0x18] sm:$0xff]
        %v1257 = vld [vmem:[%s1252 + $0x20] sm:$0xff]
        %v1258 = vld [vmem:[%s1252 + $0x28] sm:$0xff]
        %v1259 = vld [vmem:[%s1252 + $0x30] sm:$0xff]
        %v1260 = vld [vmem:[%s1252 + $0x38] sm:$0xff]
        %v1261 = vld [vmem:[%s1252 + $0x40] sm:$0xff]
        %v1262 = vld [vmem:[%s1252 + $0x48] sm:$0xff]
        %v1263 = vld [vmem:[%s1252 + $0x50] sm:$0xff]
        %v1264 = vld [vmem:[%s1252 + $0x58] sm:$0xff]
        %v1265 = vld [vmem:[%s1252 + $0x60] sm:$0xff]
        %v1266 = vld [vmem:[%s1252 + $0x68] sm:$0xff]
        %v1267 = vld [vmem:[%s1252 + $0x70] sm:$0xff]
        %v1268 = vld [vmem:[%s1252 + $0x78] sm:$0xff]
        %s1269 = scalar_lea.vmem %s0, 768
        %v1270 = vld [vmem:[%s1269] sm:$0xff]
        %v1271 = vld [vmem:[%s1269 + $0x8] sm:$0xff]
        %v1272 = vld [vmem:[%s1269 + $0x10] sm:$0xff]
        %v1273 = vld [vmem:[%s1269 + $0x18] sm:$0xff]
        %v1274 = vld [vmem:[%s1269 + $0x20] sm:$0xff]
        %v1275 = vld [vmem:[%s1269 + $0x28] sm:$0xff]
        %v1276 = vld [vmem:[%s1269 + $0x30] sm:$0xff]
        %v1277 = vld [vmem:[%s1269 + $0x38] sm:$0xff]
        %v1278 = vld [vmem:[%s1269 + $0x40] sm:$0xff]
        %v1279 = vld [vmem:[%s1269 + $0x48] sm:$0xff]
        %v1280 = vld [vmem:[%s1269 + $0x50] sm:$0xff]
        %v1281 = vld [vmem:[%s1269 + $0x58] sm:$0xff]
        %v1282 = vld [vmem:[%s1269 + $0x60] sm:$0xff]
        %v1283 = vld [vmem:[%s1269 + $0x68] sm:$0xff]
        %v1284 = vld [vmem:[%s1269 + $0x70] sm:$0xff]
        %v1285 = vld [vmem:[%s1269 + $0x78] sm:$0xff]
        %v1286 = vmul.f32 %v1253, %v1270
        %v1287 = vmul.f32 %v1254, %v1271
        %v1288 = vmul.f32 %v1255, %v1272
        %v1289 = vmul.f32 %v1256, %v1273
        %v1290 = vmul.f32 %v1257, %v1274
        %v1291 = vmul.f32 %v1258, %v1275
        %v1292 = vmul.f32 %v1259, %v1276
        %v1293 = vmul.f32 %v1260, %v1277
        %v1294 = vmul.f32 %v1261, %v1278
        %v1295 = vmul.f32 %v1262, %v1279
        %v1296 = vmul.f32 %v1263, %v1280
        %v1297 = vmul.f32 %v1264, %v1281
        %v1298 = vmul.f32 %v1265, %v1282
        %v1299 = vmul.f32 %v1266, %v1283
        %v1300 = vmul.f32 %v1267, %v1284
        %v1301 = vmul.f32 %v1268, %v1285
        %v1302 = vadd.f32 %v1236, %v1286
        %v1303 = vadd.f32 %v1237, %v1287
        %v1304 = vadd.f32 %v1238, %v1288
        %v1305 = vadd.f32 %v1239, %v1289
        %v1306 = vadd.f32 %v1240, %v1290
        %v1307 = vadd.f32 %v1241, %v1291
        %v1308 = vadd.f32 %v1242, %v1292
        %v1309 = vadd.f32 %v1243, %v1293
        %v1310 = vadd.f32 %v1244, %v1294
        %v1311 = vadd.f32 %v1245, %v1295
        %v1312 = vadd.f32 %v1246, %v1296
        %v1313 = vadd.f32 %v1247, %v1297
        %v1314 = vadd.f32 %v1248, %v1298
        %v1315 = vadd.f32 %v1249, %v1299
        %v1316 = vadd.f32 %v1250, %v1300
        %v1317 = vadd.f32 %v1251, %v1301
        %s1318 = scalar_lea.vmem [#allocation9], 896
        %v1319 = vld [vmem:[%s1318] sm:$0xff]
        %v1320 = vld [vmem:[%s1318 + $0x8] sm:$0xff]
        %v1321 = vld [vmem:[%s1318 + $0x10] sm:$0xff]
        %v1322 = vld [vmem:[%s1318 + $0x18] sm:$0xff]
        %v1323 = vld [vmem:[%s1318 + $0x20] sm:$0xff]
        %v1324 = vld [vmem:[%s1318 + $0x28] sm:$0xff]
        %v1325 = vld [vmem:[%s1318 + $0x30] sm:$0xff]
        %v1326 = vld [vmem:[%s1318 + $0x38] sm:$0xff]
        %v1327 = vld [vmem:[%s1318 + $0x40] sm:$0xff]
        %v1328 = vld [vmem:[%s1318 + $0x48] sm:$0xff]
        %v1329 = vld [vmem:[%s1318 + $0x50] sm:$0xff]
        %v1330 = vld [vmem:[%s1318 + $0x58] sm:$0xff]
        %v1331 = vld [vmem:[%s1318 + $0x60] sm:$0xff]
        %v1332 = vld [vmem:[%s1318 + $0x68] sm:$0xff]
        %v1333 = vld [vmem:[%s1318 + $0x70] sm:$0xff]
        %v1334 = vld [vmem:[%s1318 + $0x78] sm:$0xff]
        %s1335 = scalar_lea.vmem %s0, 896
        %v1336 = vld [vmem:[%s1335] sm:$0xff]
        %v1337 = vld [vmem:[%s1335 + $0x8] sm:$0xff]
        %v1338 = vld [vmem:[%s1335 + $0x10] sm:$0xff]
        %v1339 = vld [vmem:[%s1335 + $0x18] sm:$0xff]
        %v1340 = vld [vmem:[%s1335 + $0x20] sm:$0xff]
        %v1341 = vld [vmem:[%s1335 + $0x28] sm:$0xff]
        %v1342 = vld [vmem:[%s1335 + $0x30] sm:$0xff]
        %v1343 = vld [vmem:[%s1335 + $0x38] sm:$0xff]
        %v1344 = vld [vmem:[%s1335 + $0x40] sm:$0xff]
        %v1345 = vld [vmem:[%s1335 + $0x48] sm:$0xff]
        %v1346 = vld [vmem:[%s1335 + $0x50] sm:$0xff]
        %v1347 = vld [vmem:[%s1335 + $0x58] sm:$0xff]
        %v1348 = vld [vmem:[%s1335 + $0x60] sm:$0xff]
        %v1349 = vld [vmem:[%s1335 + $0x68] sm:$0xff]
        %v1350 = vld [vmem:[%s1335 + $0x70] sm:$0xff]
        %v1351 = vld [vmem:[%s1335 + $0x78] sm:$0xff]
        %v1352 = vmul.f32 %v1319, %v1336
        %v1353 = vmul.f32 %v1320, %v1337
        %v1354 = vmul.f32 %v1321, %v1338
        %v1355 = vmul.f32 %v1322, %v1339
        %v1356 = vmul.f32 %v1323, %v1340
        %v1357 = vmul.f32 %v1324, %v1341
        %v1358 = vmul.f32 %v1325, %v1342
        %v1359 = vmul.f32 %v1326, %v1343
        %v1360 = vmul.f32 %v1327, %v1344
        %v1361 = vmul.f32 %v1328, %v1345
        %v1362 = vmul.f32 %v1329, %v1346
        %v1363 = vmul.f32 %v1330, %v1347
        %v1364 = vmul.f32 %v1331, %v1348
        %v1365 = vmul.f32 %v1332, %v1349
        %v1366 = vmul.f32 %v1333, %v1350
        %v1367 = vmul.f32 %v1334, %v1351
        %v1368 = vadd.f32 %v1302, %v1352
        %v1369 = vadd.f32 %v1303, %v1353
        %v1370 = vadd.f32 %v1304, %v1354
        %v1371 = vadd.f32 %v1305, %v1355
        %v1372 = vadd.f32 %v1306, %v1356
        %v1373 = vadd.f32 %v1307, %v1357
        %v1374 = vadd.f32 %v1308, %v1358
        %v1375 = vadd.f32 %v1309, %v1359
        %v1376 = vadd.f32 %v1310, %v1360
        %v1377 = vadd.f32 %v1311, %v1361
        %v1378 = vadd.f32 %v1312, %v1362
        %v1379 = vadd.f32 %v1313, %v1363
        %v1380 = vadd.f32 %v1314, %v1364
        %v1381 = vadd.f32 %v1315, %v1365
        %v1382 = vadd.f32 %v1316, %v1366
        %v1383 = vadd.f32 %v1317, %v1367
        %v1384 = vmax.f32 %v1120, %v1124
        %v1385 = vmax.f32 %v1121, %v1125
        %v1386 = vmax.f32 %v1122, %v1126
        %v1387 = vmax.f32 %v1123, %v1127
        %v1388 = vmax.f32 %v1384, %v1128
        %v1389 = vmax.f32 %v1385, %v1129
        %v1390 = vmax.f32 %v1386, %v1130
        %v1391 = vmax.f32 %v1387, %v1131
        %v1392 = vmax.f32 %v1388, %v1132
        %v1393 = vmax.f32 %v1389, %v1133
        %v1394 = vmax.f32 %v1390, %v1134
        %v1395 = vmax.f32 %v1391, %v1135
        %v1396 = vmax.f32 %v1392, %v1393
        %v1397 = vmax.f32 %v1394, %v1395
        %v1398 = vmax.f32 %v1396, %v1397
        %1399 = vmax.xlane.f32.xlu0 %v1398
        %v1400 = vpop.xlane.xlu0 %1399
        %v1401 = vrot.slane %v1400, 4
        %v1402 = vmax.f32 %v1400, %v1401
        %v1403 = vrot.slane %v1402, 2
        %v1404 = vmax.f32 %v1402, %v1403
        %v1405 = vrot.slane %v1404, 1
        %v1406 = vmax.f32 %v1404, %v1405
        %s1407 = vtos %v1406
        %v1408 = vmax.f32 %v1368, %v1372
        %v1409 = vmax.f32 %v1369, %v1373
        %v1410 = vmax.f32 %v1370, %v1374
        %v1411 = vmax.f32 %v1371, %v1375
        %v1412 = vmax.f32 %v1408, %v1376
        %v1413 = vmax.f32 %v1409, %v1377
        %v1414 = vmax.f32 %v1410, %v1378
        %v1415 = vmax.f32 %v1411, %v1379
        %v1416 = vmax.f32 %v1412, %v1380
        %v1417 = vmax.f32 %v1413, %v1381
        %v1418 = vmax.f32 %v1414, %v1382
        %v1419 = vmax.f32 %v1415, %v1383
        %v1420 = vmax.f32 %v1416, %v1417
        %v1421 = vmax.f32 %v1418, %v1419
        %v1422 = vmax.f32 %v1420, %v1421
        %1423 = vmax.xlane.f32.xlu0 %v1422
        %v1424 = vpop.xlane.xlu0 %1423
        %v1425 = vrot.slane %v1424, 4
        %v1426 = vmax.f32 %v1424, %v1425
        %v1427 = vrot.slane %v1426, 2
        %v1428 = vmax.f32 %v1426, %v1427
        %v1429 = vrot.slane %v1428, 1
        %v1430 = vmax.f32 %v1428, %v1429
        %s1431 = vtos %v1430
        %s1432 = smul.f32 %s1407, 0.95
        %v1433 = vstv %s1432
        %vm1434 = vcmp.gt.f32.partialorder %v1120, %v1433
        %vm1435 = vcmp.gt.f32.partialorder %v1121, %v1433
        %vm1436 = vcmp.gt.f32.partialorder %v1122, %v1433
        %vm1437 = vcmp.gt.f32.partialorder %v1123, %v1433
        %vm1438 = vcmp.gt.f32.partialorder %v1124, %v1433
        %vm1439 = vcmp.gt.f32.partialorder %v1125, %v1433
        %vm1440 = vcmp.gt.f32.partialorder %v1126, %v1433
        %vm1441 = vcmp.gt.f32.partialorder %v1127, %v1433
        %vm1442 = vcmp.gt.f32.partialorder %v1128, %v1433
        %vm1443 = vcmp.gt.f32.partialorder %v1129, %v1433
        %vm1444 = vcmp.gt.f32.partialorder %v1130, %v1433
        %vm1445 = vcmp.gt.f32.partialorder %v1131, %v1433
        %vm1446 = vcmp.gt.f32.partialorder %v1132, %v1433
        %vm1447 = vcmp.gt.f32.partialorder %v1133, %v1433
        %vm1448 = vcmp.gt.f32.partialorder %v1134, %v1433
        %vm1449 = vcmp.gt.f32.partialorder %v1135, %v1433
        %vm1450 = vmpackc.low %vm1435, %vm1434
        %vm1451 = vmpackc.low %vm1437, %vm1436
        %vm1452 = vmpackc.even %vm1451, %vm1450
        %vm1453 = vmpackc.low %vm1439, %vm1438
        %vm1454 = vmpackc.low %vm1441, %vm1440
        %vm1455 = vmpackc.even %vm1454, %vm1453
        %vm1456 = vmpackc.low %vm1443, %vm1442
        %vm1457 = vmpackc.low %vm1445, %vm1444
        %vm1458 = vmpackc.even %vm1457, %vm1456
        %vm1459 = vmpackc.low %vm1447, %vm1446
        %vm1460 = vmpackc.low %vm1449, %vm1448
        %vm1461 = vmpackc.even %vm1460, %vm1459
        %v1462 = vsel %vm1452, 16843009, 0
        %v1463 = vsel %vm1455, 16843009, 0
        %v1464 = vsel %vm1458, 16843009, 0
        %v1465 = vsel %vm1461, 16843009, 0
        %v1466 = vunpack.c.0.s8 %v1462
        %v1467 = vunpack.c.1.s8 %v1462
        %v1468 = vunpack.c.2.s8 %v1462
        %v1469 = vunpack.c.3.s8 %v1462
        %v1470 = vunpack.c.0.s8 %v1463
        %v1471 = vunpack.c.1.s8 %v1463
        %v1472 = vunpack.c.2.s8 %v1463
        %v1473 = vunpack.c.3.s8 %v1463
        %v1474 = vunpack.c.0.s8 %v1464
        %v1475 = vunpack.c.1.s8 %v1464
        %v1476 = vunpack.c.2.s8 %v1464
        %v1477 = vunpack.c.3.s8 %v1464
        %v1478 = vunpack.c.0.s8 %v1465
        %v1479 = vunpack.c.1.s8 %v1465
        %v1480 = vunpack.c.2.s8 %v1465
        %v1481 = vunpack.c.3.s8 %v1465
        %v1482 = vpack.c.b16 %v1466, %v1466
        %v1483 = vpack.c.b8 %v1482, %v1482
        %v1484 = vpack.c.b16 %v1467, %v1467
        %v1485 = vpack.c.b8 %v1484, %v1484
        %v1486 = vpack.c.b16 %v1468, %v1468
        %v1487 = vpack.c.b8 %v1486, %v1486
        %v1488 = vpack.c.b16 %v1469, %v1469
        %v1489 = vpack.c.b8 %v1488, %v1488
        %v1490 = vpack.c.b16 %v1470, %v1470
        %v1491 = vpack.c.b8 %v1490, %v1490
        %v1492 = vpack.c.b16 %v1471, %v1471
        %v1493 = vpack.c.b8 %v1492, %v1492
        %v1494 = vpack.c.b16 %v1472, %v1472
        %v1495 = vpack.c.b8 %v1494, %v1494
        %v1496 = vpack.c.b16 %v1473, %v1473
        %v1497 = vpack.c.b8 %v1496, %v1496
        %v1498 = vpack.c.b16 %v1474, %v1474
        %v1499 = vpack.c.b8 %v1498, %v1498
        %v1500 = vpack.c.b16 %v1475, %v1475
        %v1501 = vpack.c.b8 %v1500, %v1500
        %v1502 = vpack.c.b16 %v1476, %v1476
        %v1503 = vpack.c.b8 %v1502, %v1502
        %v1504 = vpack.c.b16 %v1477, %v1477
        %v1505 = vpack.c.b8 %v1504, %v1504
        %v1506 = vpack.c.b16 %v1478, %v1478
        %v1507 = vpack.c.b8 %v1506, %v1506
        %v1508 = vpack.c.b16 %v1479, %v1479
        %v1509 = vpack.c.b8 %v1508, %v1508
        %v1510 = vpack.c.b16 %v1480, %v1480
        %v1511 = vpack.c.b8 %v1510, %v1510
        %v1512 = vpack.c.b16 %v1481, %v1481
        %v1513 = vpack.c.b8 %v1512, %v1512
        %1514 = vst [vmem:[%s224] sm:$0x3] %v1483
        %1515 = vst [vmem:[%s224 + $0x2] sm:$0x3] %v1485
        %1516 = vst [vmem:[%s224 + $0x4] sm:$0x3] %v1487
        %1517 = vst [vmem:[%s224 + $0x6] sm:$0x3] %v1489
        %1518 = vst [vmem:[%s224 + $0x8] sm:$0x3] %v1491
        %1519 = vst [vmem:[%s224 + $0xa] sm:$0x3] %v1493
        %1520 = vst [vmem:[%s224 + $0xc] sm:$0x3] %v1495
        %1521 = vst [vmem:[%s224 + $0xe] sm:$0x3] %v1497
        %1522 = vst [vmem:[%s224 + $0x10] sm:$0x3] %v1499
        %1523 = vst [vmem:[%s224 + $0x12] sm:$0x3] %v1501
        %1524 = vst [vmem:[%s224 + $0x14] sm:$0x3] %v1503
        %1525 = vst [vmem:[%s224 + $0x16] sm:$0x3] %v1505
        %1526 = vst [vmem:[%s224 + $0x18] sm:$0x3] %v1507
        %1527 = vst [vmem:[%s224 + $0x1a] sm:$0x3] %v1509
        %1528 = vst [vmem:[%s224 + $0x1c] sm:$0x3] %v1511
        %1529 = vst [vmem:[%s224 + $0x1e] sm:$0x3] %v1513
        %1530 = vst [vmem:[%s231] sm:$0xff] %v1120
        %1531 = vst [vmem:[%s231 + $0x8] sm:$0xff] %v1121
        %1532 = vst [vmem:[%s231 + $0x10] sm:$0xff] %v1122
        %1533 = vst [vmem:[%s231 + $0x18] sm:$0xff] %v1123
        %1534 = vst [vmem:[%s231 + $0x20] sm:$0xff] %v1124
        %1535 = vst [vmem:[%s231 + $0x28] sm:$0xff] %v1125
        %1536 = vst [vmem:[%s231 + $0x30] sm:$0xff] %v1126
        %1537 = vst [vmem:[%s231 + $0x38] sm:$0xff] %v1127
        %1538 = vst [vmem:[%s231 + $0x40] sm:$0xff] %v1128
        %1539 = vst [vmem:[%s231 + $0x48] sm:$0xff] %v1129
        %1540 = vst [vmem:[%s231 + $0x50] sm:$0xff] %v1130
        %1541 = vst [vmem:[%s231 + $0x58] sm:$0xff] %v1131
        %1542 = vst [vmem:[%s231 + $0x60] sm:$0xff] %v1132
        %1543 = vst [vmem:[%s231 + $0x68] sm:$0xff] %v1133
        %1544 = vst [vmem:[%s231 + $0x70] sm:$0xff] %v1134
        %1545 = vst [vmem:[%s231 + $0x78] sm:$0xff] %v1135
        %1546 = vst [vmem:[%s238] sm:$0xff] %v1368
        %1547 = vst [vmem:[%s238 + $0x8] sm:$0xff] %v1369
        %1548 = vst [vmem:[%s238 + $0x10] sm:$0xff] %v1370
        %1549 = vst [vmem:[%s238 + $0x18] sm:$0xff] %v1371
        %1550 = vst [vmem:[%s238 + $0x20] sm:$0xff] %v1372
        %1551 = vst [vmem:[%s238 + $0x28] sm:$0xff] %v1373
        %1552 = vst [vmem:[%s238 + $0x30] sm:$0xff] %v1374
        %1553 = vst [vmem:[%s238 + $0x38] sm:$0xff] %v1375
        %1554 = vst [vmem:[%s238 + $0x40] sm:$0xff] %v1376
        %1555 = vst [vmem:[%s238 + $0x48] sm:$0xff] %v1377
        %1556 = vst [vmem:[%s238 + $0x50] sm:$0xff] %v1378
        %1557 = vst [vmem:[%s238 + $0x58] sm:$0xff] %v1379
        %1558 = vst [vmem:[%s238 + $0x60] sm:$0xff] %v1380
        %1559 = vst [vmem:[%s238 + $0x68] sm:$0xff] %v1381
        %1560 = vst [vmem:[%s238 + $0x70] sm:$0xff] %v1382
        %1561 = vst [vmem:[%s238 + $0x78] sm:$0xff] %v1383
        %v1562 = vlaneseq
        %v1563 = vand.u32 %v1562, 127
        %vm1564 = vcmp.eq.s32.totalorder %v1563, 0
        %v1565 = vstv %s1407
        %v1566 = vstv %s1431
        %v1567 = vsel %vm1564, %v1565, %v1566
        %1568 = vst [vmem:[%s244] sm:$0x1] %v1567
        %s1569 = sand.u32 %s81, 1
        %s1570 = scalar_lea.sflag [#allocation3], %s1569
        %s1571 = sand.u32 %s81, 1
        %s1572 = smul.addr %s1571, 32
        %s1573 = scalar_lea.vmem [#allocation2], %s1572
        %s1574 = sand.u32 %s26, 1
        %s1575 = scalar_lea.sflag [#allocation5], %s1574
        %s1576 = sand.u32 %s107, 1
        %s1577 = smul.addr %s1576, 128
        %s1578 = scalar_lea.vmem [#allocation4], %s1577
        %s1579 = sand.u32 %s26, 1
        %s1580 = scalar_lea.sflag [#allocation5], %s1579
        %s1581 = sand.u32 %s133, 1
        %s1582 = smul.addr %s1581, 128
        %s1583 = scalar_lea.vmem [#allocation6], %s1582
        %s1584 = sand.u32 %s159, 1
        %s1585 = scalar_lea.sflag [#allocation8], %s1584
        %s1586 = sand.u32 %s159, 1
        %s1587 = scalar_lea.vmem [#allocation7], %s1586
        // Predicated region
        $region29: #{_d2l_tensor_path.2} parent=27 // pred_check
          %p1588 = pneg %p91
        $region30: #{_d2l_tensor_path.2} parent=27 // pred_check_branch
          %1590 = sbr.rel (%p1588) target = $region32
        $region31: #{_d2l_tensor_path.2} parent=27 // pred_region
          %s1592 = ssub.s32 512, 512
          %1593 = vsyncadd %s1570, %s1592
          %s1594 = smul.addr %s26, 16
          %s1595 = smul.addr %s1594, 32
          %s1596 = scalar_lea.hbm %s2, %s1595
          %s1597 = sshll.u32 %s1573, 4
          %s1598 = int_to_ptr.vmem [resolvable:$true] %s1597
          %1603 = dma.vmem_to_hbm [thread:$0]  %s1598, 512, %s1596, %s1570, 32, 32, 2
        $region32: #{_d2l_tensor_path.2} parent=27 // pred_fallthru
          _
        // Predicated region
        $region33: #{_d2l_tensor_path.2} parent=27 // pred_check
          %p1604 = pneg %p117
        $region34: #{_d2l_tensor_path.2} parent=27 // pred_check_branch
          %1606 = sbr.rel (%p1604) target = $region36
        $region35: #{_d2l_tensor_path.2} parent=27 // pred_region
          %s1608 = ssub.s32 2048, 2048
          %1609 = vsyncadd %s1575, %s1608
          %s1610 = smul.addr %s26, 16
          %s1611 = smul.addr %s1610, 128
          %s1612 = scalar_lea.hbm %s3, %s1611
          %s1613 = sshll.u32 %s1578, 4
          %s1614 = int_to_ptr.vmem [resolvable:$true] %s1613
          %1619 = dma.vmem_to_hbm [thread:$0]  %s1614, 2048, %s1612, %s1575, 128, 128, 8
        $region36: #{_d2l_tensor_path.2} parent=27 // pred_fallthru
          _
        // Predicated region
        $region37: #{_d2l_tensor_path.2} parent=27 // pred_check
          %p1620 = pneg %p143
        $region38: #{_d2l_tensor_path.2} parent=27 // pred_check_branch
          %1622 = sbr.rel (%p1620) target = $region40
        $region39: #{_d2l_tensor_path.2} parent=27 // pred_region
          %s1624 = ssub.s32 2048, 2048
          %1625 = vsyncadd %s1580, %s1624
          %s1626 = smul.addr %s26, 16
          %s1627 = smul.addr %s1626, 128
          %s1628 = scalar_lea.hbm %s4, %s1627
          %s1629 = sshll.u32 %s1583, 4
          %s1630 = int_to_ptr.vmem [resolvable:$true] %s1629
          %1635 = dma.vmem_to_hbm [thread:$0]  %s1630, 2048, %s1628, %s1580, 128, 128, 8
        $region40: #{_d2l_tensor_path.2} parent=27 // pred_fallthru
          _
        // Predicated region
        $region41: #{_d2l_tensor_path.2} parent=27 // pred_check
          %p1636 = pneg %p169
        $region42: #{_d2l_tensor_path.2} parent=27 // pred_check_branch
          %1638 = sbr.rel (%p1636) target = $region44
        $region43: #{_d2l_tensor_path.2} parent=27 // pred_region
          %s1640 = ssub.s32 16, 16
          %1641 = vsyncadd %s1585, %s1640
          %s1642 = smul.addr %s26, 16
          %s1643 = scalar_lea.hbm %s5, %s1642
          %s1645 = sshll.u32 %s1587, 4
          %s1646 = int_to_ptr.vmem [resolvable:$true] %s1645
          %1648 = dma.vmem_to_hbm [thread:$0]  %s1646, 16, %s1643, %s1585
        $region44: #{_d2l_tensor_path.2} parent=27 // pred_fallthru
          _
      $region28: #{_d2l_tensor_path.2} parent=5 // pred_fallthru
        _
      %p1649 = scmp.le.s32.totalorder 2, %s21
      // Predicated region
      $region45: #{_d2l_tensor_path.2} parent=5 // pred_check
        %p1650 = pneg %p1649
      $region46: #{_d2l_tensor_path.2} parent=5 // pred_check_branch
        %1652 = sbr.rel (%p1650) target = $region48
      $region47: #{_d2l_tensor_path.2} parent=5 // pred_region
        %s1653 = ssub.s32 %s21, 2
        // Predicated region
        $region49: #{_d2l_tensor_path.2} parent=47 // pred_check
          %p1654 = pneg %p97
        $region50: #{_d2l_tensor_path.2} parent=47 // pred_check_branch
          %1656 = sbr.rel (%p1654) target = $region52
        $region51: #{_d2l_tensor_path.2} parent=47 // pred_region
          %s1657 = sand.u32 %s82, 1
          %s1658 = scalar_lea.sflag [#allocation3], %s1657
          %s1659 = sand.u32 %s82, 1
          %s1660 = smul.addr %s1659, 32
          %s1661 = scalar_lea.vmem [#allocation2], %s1660
          %1662 = dma.done %s1658, 512
        $region52: #{_d2l_tensor_path.2} parent=47 // pred_fallthru
          _
        // Predicated region
        $region53: #{_d2l_tensor_path.2} parent=47 // pred_check
          %p1663 = pneg %p123
        $region54: #{_d2l_tensor_path.2} parent=47 // pred_check_branch
          %1665 = sbr.rel (%p1663) target = $region56
        $region55: #{_d2l_tensor_path.2} parent=47 // pred_region
          %s1666 = sand.u32 %s27, 1
          %s1667 = scalar_lea.sflag [#allocation5], %s1666
          %s1668 = sand.u32 %s108, 1
          %s1669 = smul.addr %s1668, 128
          %s1670 = scalar_lea.vmem [#allocation4], %s1669
          %1671 = dma.done %s1667, 2048
        $region56: #{_d2l_tensor_path.2} parent=47 // pred_fallthru
          _
        // Predicated region
        $region57: #{_d2l_tensor_path.2} parent=47 // pred_check
          %p1672 = pneg %p149
        $region58: #{_d2l_tensor_path.2} parent=47 // pred_check_branch
          %1674 = sbr.rel (%p1672) target = $region60
        $region59: #{_d2l_tensor_path.2} parent=47 // pred_region
          %s1675 = sand.u32 %s27, 1
          %s1676 = scalar_lea.sflag [#allocation5], %s1675
          %s1677 = sand.u32 %s134, 1
          %s1678 = smul.addr %s1677, 128
          %s1679 = scalar_lea.vmem [#allocation6], %s1678
          %1680 = dma.done %s1676, 2048
        $region60: #{_d2l_tensor_path.2} parent=47 // pred_fallthru
          _
        // Predicated region
        $region61: #{_d2l_tensor_path.2} parent=47 // pred_check
          %p1681 = pneg %p175
        $region62: #{_d2l_tensor_path.2} parent=47 // pred_check_branch
          %1683 = sbr.rel (%p1681) target = $region64
        $region63: #{_d2l_tensor_path.2} parent=47 // pred_region
          %s1684 = sand.u32 %s160, 1
          %s1685 = scalar_lea.sflag [#allocation8], %s1684
          %s1686 = sand.u32 %s160, 1
          %s1687 = scalar_lea.vmem [#allocation7], %s1686
          %1688 = dma.done %s1685, 16
        $region64: #{_d2l_tensor_path.2} parent=47 // pred_fallthru
          _
      $region48: #{_d2l_tensor_path.2} parent=5 // pred_fallthru
        _
    $region6: #{_d2l_tensor_path.2} parent=1 // loop_footer
      %s25 = sadd.s32 1, %s21
    $region7: #{_d2l_tensor_path.2} parent=1 // loop_footer_branch
      %20 = sbr.rel target = $region3
    $region8: #{_d2l_tensor_path.2} parent=1 // loop_exit
      _
    %1689 = vsyncpa [#allocation3], 1
    %s1690 = scalar_lea.sflag [#allocation3], 1
    %1691 = vsyncpa %s1690, 1
    %1692 = vsyncpa [#allocation5], 1
    %s1693 = scalar_lea.sflag [#allocation5], 1
    %1694 = vsyncpa %s1693, 1
    %1695 = vsyncpa [#allocation8], 1
    %s1696 = scalar_lea.sflag [#allocation8], 1
    %1697 = vsyncpa %s1696, 1

</llo_original>
